<compile_context>
chip_gen: v7x
topology: tpu7x:2x2x1
jax: 0.10.0
libtpu: 0.0.40
codegen_flags: <defaults>
</compile_context>

<pallas_src>
import jax
import jax.numpy as jnp
from jax.experimental import pallas as pl
from jax.experimental.pallas import tpu as pltpu

H1 = 600          # fc1 output features
H2 = 300          # fc2 output features
BN_EPS = 1e-5
LANE = 128


def _round_up(n, m):
    return ((n + m - 1) // m) * m


H1P = _round_up(H1, LANE)   # 640 = 5 * 128
H2P = _round_up(H2, LANE)   # 384 = 3 * 128


# --------------------------------------------------------------------------
# Kernel
# --------------------------------------------------------------------------
def critic_kernel(x_ref, a_ref,
                  w1_ref, b1_ref, gamma_ref, beta_ref,
                  w2_ref, b2p_ref, waexp_ref,
                  w3_ref, b3_ref,
                  out_ref):
    inv_b = 1.0 / x_ref.shape[0]          # static batch size

    # ---- fc1 : (B, S) @ (S, 640) on the MXU, bf16 in / f32 acc.
    # Input cast happens in-kernel (no wrapper pad/convert launches).
    h1 = jnp.dot(x_ref[...].astype(jnp.bfloat16), w1_ref[...],
                 preferred_element_type=jnp.float32) + b1_ref[...]

    # ---- BatchNorm1d(600), training mode, biased variance (f32 VPU math).
    # One-pass stats; gamma folded into scale, mean folded into shift, so the
    # (B,640) normalize is a single fused multiply-add.
    mean = jnp.sum(h1, axis=0, keepdims=True) * inv_b                # (1,640)
    msq = jnp.sum(h1 * h1, axis=0, keepdims=True) * inv_b            # (1,640)
    var = jnp.maximum(msq - mean * mean, 0.0)                        # biased
    scale = gamma_ref[...] * jax.lax.rsqrt(var + BN_EPS)             # (1,640)
    shift = beta_ref[...] - mean * scale                             # (1,640)
    h1r = jnp.maximum(h1 * scale + shift, 0.0)                       # BN+ReLU

    # ---- fc2 (+ folded action_fc), both bf16 MXU passes with f32 acc ----
    # h2 = h1r @ w2     : (B, 640) @ (640, 384)
    # xa = a   @ wa_exp : (B, A)   @ (A, 384)   (action_fc column replicated,
    #                     so no (B,1)->(B,384) lane broadcast is needed)
    h2 = jnp.dot(h1r.astype(jnp.bfloat16), w2_ref[...],
                 preferred_element_type=jnp.float32)
    xa = jnp.dot(a_ref[...].astype(jnp.bfloat16), waexp_ref[...],
                 preferred_element_type=jnp.float32)
    # b2p = b2 + ba (folded in param prep); relu(fc2(x) + action_fc(a))
    x2 = jnp.maximum(h2 + xa + b2p_ref[...], 0.0)                    # (B, 384)

    # ---- fc3 : width-1 output as VPU multiply + lane reduction (no MXU) ----
    out_ref[...] = (jnp.sum(x2 * w3_ref[...], axis=-1, keepdims=True)
                    + b3_ref[0, 0])


# --------------------------------------------------------------------------
# Wrapper
# --------------------------------------------------------------------------
def critic_forward(x_state, action, kp):
    """x_state: (B, state_size) f32, action: (B, action_size); kp: padded params.

    No wrapper-side math: inputs go to the kernel raw; all padding is baked
    into the weights and the bf16 cast happens inside the kernel.
    """
    B, S = x_state.shape
    A = action.shape[1]

    vmem = pl.BlockSpec(memory_space=pltpu.MemorySpace.VMEM)
    smem = pl.BlockSpec(memory_space=pltpu.MemorySpace.SMEM)

    args = (x_state, action,
            kp["w1"], kp["b1"], kp["gamma"], kp["beta"],
            kp["w2"], kp["b2p"], kp["wa_exp"],
            kp["w3_row"], kp["b3"])

    # Advisory cost estimate so XLA can overlap surrounding ops.
    flops = 2 * B * (S * H1P + H1P * H2P + A * H2P + H2P) + 12 * B * H1P
    bytes_accessed = sum(int(a.size) * a.dtype.itemsize for a in args) + B * 4
    cost = pl.CostEstimate(flops=flops, transcendentals=H1P,
                           bytes_accessed=bytes_accessed)

    return pl.pallas_call(
        critic_kernel,
        out_shape=jax.ShapeDtypeStruct((B, 1), jnp.float32),
        in_specs=[vmem] * 10 + [smem],     # b3 scalar lives in SMEM
        out_specs=vmem,
        cost_estimate=cost,
        compiler_params=pltpu.CompilerParams(vmem_limit_bytes=32 * 1024 * 1024),
    )(*args)


# --------------------------------------------------------------------------
# Parameters
# --------------------------------------------------------------------------
def init_params(key, state_size, action_size):
    """Logical (unpadded, f32) params mirroring the PyTorch module's init."""
    ks = jax.random.split(key, 8)

    def uni(k, shape, bound):
        return jax.random.uniform(k, shape, jnp.float32, -bound, bound)

    # fc1: default PyTorch Linear init, bound = 1/sqrt(fan_in)
    b1_bound = 1.0 / jnp.sqrt(jnp.float32(state_size))
    w1 = uni(ks[0], (state_size, H1), b1_bound)
    b1 = uni(ks[1], (1, H1), b1_bound)
    # fc2: weights overridden with uniform(-0.0015, 0.0015); bias keeps default
    w2 = uni(ks[2], (H1, H2), 0.0015)
    b2 = uni(ks[3], (1, H2), 1.0 / jnp.sqrt(jnp.float32(H1)))
    # fc3: weights overridden with uniform(-0.003, 0.003); bias keeps default
    w3 = uni(ks[4], (H2, 1), 0.003)
    b3 = uni(ks[5], (1, 1), 1.0 / jnp.sqrt(jnp.float32(H2)))
    # action_fc: default init
    wa_bound = 1.0 / jnp.sqrt(jnp.float32(action_size))
    wa = uni(ks[6], (action_size, 1), wa_bound)
    ba = uni(ks[7], (1, 1), wa_bound)
    # BatchNorm1d(600) affine params (fresh module: gamma=1, beta=0)
    gamma = jnp.ones((1, H1), jnp.float32)
    beta = jnp.zeros((1, H1), jnp.float32)
    return dict(w1=w1, b1=b1, gamma=gamma, beta=beta,
                w2=w2, b2=b2, wa=wa, ba=ba, w3=w3, b3=b3)


def prepare_kernel_params(p):
    """Pad feature dims to lane multiples, fold scalars, cast MXU weights to bf16.

    Zero padding is exact end-to-end: padded weight rows/cols, biases, gamma
    and beta are 0, so padded feature columns stay identically 0 (gamma=0
    kills the rsqrt(eps) factor in BN; ReLU keeps them 0).
    """
    S = p["w1"].shape[0]
    A = p["wa"].shape[0]

    def padf(arr, shape):
        out = jnp.zeros(shape, jnp.float32)
        return out.at[:arr.shape[0], :arr.shape[1]].set(arr)

    w1 = padf(p["w1"], (S, H1P)).astype(jnp.bfloat16)          # K unpadded
    b1 = padf(p["b1"], (1, H1P))
    gamma = padf(p["gamma"], (1, H1P))
    beta = padf(p["beta"], (1, H1P))
    w2 = padf(p["w2"], (H1P, H2P)).astype(jnp.bfloat16)
    # Fold the action_fc bias into the fc2 bias (both are added before ReLU).
    b2p = padf(p["b2"] + p["ba"], (1, H2P))
    # Expand action_fc's single output column across all H2 features so the
    # (B,1) broadcast becomes a plain elementwise add; bf16 for one MXU pass.
    wa_exp = padf(jnp.tile(p["wa"], (1, H2)), (A, H2P)).astype(jnp.bfloat16)
    # fc3 weights as a lane-aligned row vector for the VPU reduction.
    w3_row = padf(p["w3"].T, (1, H2P))
    b3 = p["b3"].astype(jnp.float32)            # (1,1) scalar -> SMEM
    return dict(w1=w1, b1=b1, gamma=gamma, beta=beta, w2=w2, b2p=b2p,
                wa_exp=wa_exp, w3_row=w3_row, b3=b3)


# --------------------------------------------------------------------------
# Pure-JAX f32 reference (PyTorch semantics) for correctness checking
# --------------------------------------------------------------------------
def critic_ref(x_state, action, p):
    h1 = x_state @ p["w1"] + p["b1"]
    mean = jnp.mean(h1, axis=0, keepdims=True)
    var = jnp.mean((h1 - mean) ** 2, axis=0, keepdims=True)
    h1 = (h1 - mean) / jnp.sqrt(var + BN_EPS) * p["gamma"] + p["beta"]
    h1 = jnp.maximum(h1, 0.0)
    h2 = h1 @ p["w2"] + p["b2"]
    xa = action.astype(jnp.float32) @ p["wa"] + p["ba"]
    x = jnp.maximum(h2 + xa, 0.0)
    return x @ p["w3"] + p["b3"]


if __name__ == "__main__":
    B, STATE_SIZE, ACTION_SIZE = 8, 16, 4

    key = jax.random.PRNGKey(0)
    k_p, k_x, k_a = jax.random.split(key, 3)
    params = init_params(k_p, STATE_SIZE, ACTION_SIZE)
    kparams = prepare_kernel_params(params)

    x_state = jax.random.normal(k_x, (B, STATE_SIZE), jnp.float32)
    action = jax.random.uniform(k_a, (B, ACTION_SIZE), jnp.float32, -1.0, 1.0)

    out = critic_forward(x_state, action, kparams)
    jax.block_until_ready(out)

    ref = critic_ref(x_state, action, params)
    assert out.shape == (B, 1)
    # Loose tolerance accounts for bf16 MXU operands (fc1/fc2/action path);
    # all BatchNorm statistics and elementwise math remain f32.
    assert jnp.allclose(out, ref, atol=2e-3, rtol=2e-2), (out, ref)
    print("KERNEL_OK")
</pallas_src>

<mosaic_0001>
module attributes {stable_mosaic.version = 11 : i64} {
  func.func @critic_kernel(%arg0: memref<8x16xf32, #tpu.memory_space<vmem>>, %arg1: memref<8x4xf32, #tpu.memory_space<vmem>>, %arg2: memref<16x640xbf16, #tpu.memory_space<vmem>>, %arg3: memref<1x640xf32, #tpu.memory_space<vmem>>, %arg4: memref<1x640xf32, #tpu.memory_space<vmem>>, %arg5: memref<1x640xf32, #tpu.memory_space<vmem>>, %arg6: memref<640x384xbf16, #tpu.memory_space<vmem>>, %arg7: memref<1x384xf32, #tpu.memory_space<vmem>>, %arg8: memref<4x384xbf16, #tpu.memory_space<vmem>>, %arg9: memref<1x384xf32, #tpu.memory_space<vmem>>, %arg10: memref<1x1xf32, #tpu.memory_space<smem>>, %arg11: memref<8x1xf32, #tpu.memory_space<vmem>>) attributes {dimension_semantics = [], scalar_prefetch = 0 : i64, scratch_operands = 0 : i64, tpu.core_type = #tpu.core_type<tc>} {
    %c0 = arith.constant 0 : index
    %c0_0 = arith.constant 0 : index
    %0 = vector.load %arg0[%c0, %c0_0] : memref<8x16xf32, #tpu.memory_space<vmem>>, vector<8x16xf32>
    %1 = arith.truncf %0 : vector<8x16xf32> to vector<8x16xbf16>
    %c0_1 = arith.constant 0 : index
    %c0_2 = arith.constant 0 : index
    %2 = vector.load %arg2[%c0_1, %c0_2] : memref<16x640xbf16, #tpu.memory_space<vmem>>, vector<16x640xbf16>
    %cst = arith.constant dense<0.000000e+00> : vector<8x640xf32>
    %3 = tpu.matmul %1, %2, %cst {dimension_numbers = #tpu.dot_dimension_numbers<[1], [0], [0], [1], [0, 0, 1, 1], [], []>} : vector<8x16xbf16>, vector<16x640xbf16>, vector<8x640xf32> -> vector<8x640xf32>
    %c0_3 = arith.constant 0 : index
    %c0_4 = arith.constant 0 : index
    %4 = vector.load %arg3[%c0_3, %c0_4] : memref<1x640xf32, #tpu.memory_space<vmem>>, vector<1x640xf32>
    %5 = vector.broadcast %4 : vector<1x640xf32> to vector<8x640xf32>
    %6 = arith.addf %3, %5 : vector<8x640xf32>
    %cst_5 = arith.constant dense<0.000000e+00> : vector<640xf32>
    %7 = vector.multi_reduction <add>, %6, %cst_5 [0] : vector<8x640xf32> to vector<640xf32>
    %8 = vector.shape_cast %7 : vector<640xf32> to vector<1x640xf32>
    %cst_6 = arith.constant 1.250000e-01 : f32
    %9 = vector.broadcast %cst_6 : f32 to vector<1x640xf32>
    %10 = arith.mulf %8, %9 : vector<1x640xf32>
    %11 = arith.mulf %6, %6 : vector<8x640xf32>
    %cst_7 = arith.constant dense<0.000000e+00> : vector<640xf32>
    %12 = vector.multi_reduction <add>, %11, %cst_7 [0] : vector<8x640xf32> to vector<640xf32>
    %13 = vector.shape_cast %12 : vector<640xf32> to vector<1x640xf32>
    %cst_8 = arith.constant 1.250000e-01 : f32
    %14 = vector.broadcast %cst_8 : f32 to vector<1x640xf32>
    %15 = arith.mulf %13, %14 : vector<1x640xf32>
    %16 = arith.mulf %10, %10 : vector<1x640xf32>
    %17 = arith.subf %15, %16 : vector<1x640xf32>
    %cst_9 = arith.constant 0.000000e+00 : f32
    %18 = vector.broadcast %cst_9 : f32 to vector<1x640xf32>
    %19 = arith.maximumf %17, %18 : vector<1x640xf32>
    %c0_10 = arith.constant 0 : index
    %c0_11 = arith.constant 0 : index
    %20 = vector.load %arg4[%c0_10, %c0_11] : memref<1x640xf32, #tpu.memory_space<vmem>>, vector<1x640xf32>
    %cst_12 = arith.constant 9.99999974E-6 : f32
    %21 = vector.broadcast %cst_12 : f32 to vector<1x640xf32>
    %22 = arith.addf %19, %21 : vector<1x640xf32>
    %23 = math.rsqrt %22 : vector<1x640xf32>
    %24 = arith.mulf %20, %23 : vector<1x640xf32>
    %c0_13 = arith.constant 0 : index
    %c0_14 = arith.constant 0 : index
    %25 = vector.load %arg5[%c0_13, %c0_14] : memref<1x640xf32, #tpu.memory_space<vmem>>, vector<1x640xf32>
    %26 = arith.mulf %10, %24 : vector<1x640xf32>
    %27 = arith.subf %25, %26 : vector<1x640xf32>
    %28 = vector.broadcast %24 : vector<1x640xf32> to vector<8x640xf32>
    %29 = arith.mulf %6, %28 : vector<8x640xf32>
    %30 = vector.broadcast %27 : vector<1x640xf32> to vector<8x640xf32>
    %31 = arith.addf %29, %30 : vector<8x640xf32>
    %cst_15 = arith.constant 0.000000e+00 : f32
    %32 = vector.broadcast %cst_15 : f32 to vector<8x640xf32>
    %33 = arith.maximumf %31, %32 : vector<8x640xf32>
    %34 = arith.truncf %33 : vector<8x640xf32> to vector<8x640xbf16>
    %c0_16 = arith.constant 0 : index
    %c0_17 = arith.constant 0 : index
    %35 = vector.load %arg6[%c0_16, %c0_17] : memref<640x384xbf16, #tpu.memory_space<vmem>>, vector<640x384xbf16>
    %cst_18 = arith.constant dense<0.000000e+00> : vector<8x384xf32>
    %36 = tpu.matmul %34, %35, %cst_18 {dimension_numbers = #tpu.dot_dimension_numbers<[1], [0], [0], [1], [0, 0, 1, 1], [], []>} : vector<8x640xbf16>, vector<640x384xbf16>, vector<8x384xf32> -> vector<8x384xf32>
    %c0_19 = arith.constant 0 : index
    %c0_20 = arith.constant 0 : index
    %37 = vector.load %arg1[%c0_19, %c0_20] : memref<8x4xf32, #tpu.memory_space<vmem>>, vector<8x4xf32>
    %38 = arith.truncf %37 : vector<8x4xf32> to vector<8x4xbf16>
    %c0_21 = arith.constant 0 : index
    %c0_22 = arith.constant 0 : index
    %39 = vector.load %arg8[%c0_21, %c0_22] : memref<4x384xbf16, #tpu.memory_space<vmem>>, vector<4x384xbf16>
    %cst_23 = arith.constant dense<0.000000e+00> : vector<8x384xf32>
    %40 = tpu.matmul %38, %39, %cst_23 {dimension_numbers = #tpu.dot_dimension_numbers<[1], [0], [0], [1], [0, 0, 1, 1], [], []>} : vector<8x4xbf16>, vector<4x384xbf16>, vector<8x384xf32> -> vector<8x384xf32>
    %41 = arith.addf %36, %40 : vector<8x384xf32>
    %c0_24 = arith.constant 0 : index
    %c0_25 = arith.constant 0 : index
    %42 = vector.load %arg7[%c0_24, %c0_25] : memref<1x384xf32, #tpu.memory_space<vmem>>, vector<1x384xf32>
    %43 = vector.broadcast %42 : vector<1x384xf32> to vector<8x384xf32>
    %44 = arith.addf %41, %43 : vector<8x384xf32>
    %cst_26 = arith.constant 0.000000e+00 : f32
    %45 = vector.broadcast %cst_26 : f32 to vector<8x384xf32>
    %46 = arith.maximumf %44, %45 : vector<8x384xf32>
    %c0_27 = arith.constant 0 : index
    %c0_28 = arith.constant 0 : index
    %47 = vector.load %arg9[%c0_27, %c0_28] : memref<1x384xf32, #tpu.memory_space<vmem>>, vector<1x384xf32>
    %48 = vector.broadcast %47 : vector<1x384xf32> to vector<8x384xf32>
    %49 = arith.mulf %46, %48 : vector<8x384xf32>
    %cst_29 = arith.constant dense<0.000000e+00> : vector<8xf32>
    %50 = vector.multi_reduction <add>, %49, %cst_29 [1] : vector<8x384xf32> to vector<8xf32>
    %51 = vector.shape_cast %50 : vector<8xf32> to vector<8x1xf32>
    %c0_30 = arith.constant 0 : index
    %c0_31 = arith.constant 0 : index
    %52 = memref.load %arg10[%c0_30, %c0_31] : memref<1x1xf32, #tpu.memory_space<smem>>
    %53 = vector.broadcast %52 : f32 to vector<8x1xf32>
    %54 = arith.addf %51, %53 : vector<8x1xf32>
    %c0_32 = arith.constant 0 : index
    %c0_33 = arith.constant 0 : index
    %55 = vector.load %arg11[%c0_32, %c0_33] : memref<8x1xf32, #tpu.memory_space<vmem>>, vector<8x1xf32>
    tpu.vector_store %arg11[%c0_32, %c0_33], %54 {strides = array<i32>} : memref<8x1xf32, #tpu.memory_space<vmem>>, vector<8x1xf32>,
    return
  }
}

</mosaic_0001>

<llo_original>
// kernel: tpu_custom_call.1
$region0: #{tpu_custom_call.1}
  #allocation0 [shape = 'u32[]', space=smem, size = 0x4, offset = 0x4, fixed_abs, tag = 'smem constant byte address 0x4 - core index']
  #allocation1 [shape = 'u32[144,128]{1,0:T(1,128)}', space=vmem, size = 0x12000, scoped, tag = 'internal scratch']
  #allocation2 [shape = 'f32[1,1]{1,0:T(1,128)S(6)}', space=smem, size = 0x200, scoped, tag = 'scoped memory for tpu_custom_call.1']
  %s0 = inlined_call_operand.vmem [shape: f32[8,16], index: 0, kind: input, shape index: {}]
  %s1 = inlined_call_operand.vmem [shape: f32[8,4], index: 1, kind: input, shape index: {}]
  %s2 = inlined_call_operand.hbm [shape: bf16[16,640], index: 2, kind: input, shape index: {}]
  %s3 = inlined_call_operand.vmem [shape: f32[1,640], index: 3, kind: input, shape index: {}]
  %s4 = inlined_call_operand.vmem [shape: f32[1,640], index: 4, kind: input, shape index: {}]
  %s5 = inlined_call_operand.vmem [shape: f32[1,640], index: 5, kind: input, shape index: {}]
  %s6 = inlined_call_operand.hbm [shape: bf16[640,384], index: 6, kind: input, shape index: {}]
  %s7 = inlined_call_operand.vmem [shape: f32[1,384], index: 7, kind: input, shape index: {}]
  %s8 = inlined_call_operand.vmem [shape: bf16[4,384], index: 8, kind: input, shape index: {}]
  %s9 = inlined_call_operand.vmem [shape: f32[1,384], index: 9, kind: input, shape index: {}]
  %s10 = inlined_call_operand.<no memory space> [shape: f32[1,1], index: 10, kind: input, shape index: {}]
  %s11 = inlined_call_operand.vmem [shape: f32[8,1], index: 11, kind: output, shape index: {}]
  %s12 = sld [smem:[#allocation0]]
  $region62: #{tpu_custom_call.1} parent=0
    _
  %s14 = ssub.s32 1, %s12
  %s15 = scalar_select 0, %s14, %s12
  %16 = sst [smem:[#allocation2]] %s10
  $region1: #{tpu_custom_call.1} parent=0
    #allocation3 [shape = 'u8[20480]{0}', space=vmem, size = 0x5000, scoped, tag = 'input window, operand 2, single buffered']
    #allocation4 [shape = 's32[1]{0}', space=sflag, size = 0x4, scoped, tag = 'scoped memory for tpu_custom_call.1']
    #allocation5 [shape = 'u8[491520]{0}', space=vmem, size = 0x78000, scoped, tag = 'input window, operand 6, single buffered']
    #allocation6 [shape = 's32[1]{0}', space=sflag, size = 0x4, scoped, tag = 'scoped memory for tpu_custom_call.1']
    %17 = vsyncpa [#allocation4], 0
    %18 = vsyncpa [#allocation6], 0
    // Predicated region
    $region2: #{tpu_custom_call.1} parent=1 // pred_check
      _
    $region3: #{tpu_custom_call.1} parent=1 // pred_check_branch
      %20 = sbr.rel (0) target = $region5
    $region4: #{tpu_custom_call.1} parent=1 // pred_region
      _
    $region5: #{tpu_custom_call.1} parent=1 // pred_fallthru
      _
    // Predicated region
    $region6: #{tpu_custom_call.1} parent=1 // pred_check
      _
    $region7: #{tpu_custom_call.1} parent=1 // pred_check_branch
      %22 = sbr.rel (0) target = $region9
    $region8: #{tpu_custom_call.1} parent=1 // pred_region
      _
    $region9: #{tpu_custom_call.1} parent=1 // pred_fallthru
      _
    // Predicated region
    $region10: #{tpu_custom_call.1} parent=1 // pred_check
      _
    $region11: #{tpu_custom_call.1} parent=1 // pred_check_branch
      %24 = sbr.rel (0) target = $region13
    $region12: #{tpu_custom_call.1} parent=1 // pred_region
      %s26 = ssub.s32 640, 640
      %27 = vsyncadd [#allocation4], %s26
      %s28 = sshll.u32 [#allocation3], 4
      %s29 = int_to_ptr.vmem [resolvable:$true] %s28
      %34 = dma.hbm_to_vmem [thread:$0]  %s2, 640, %s29, [#allocation4], 320, 320, 20
    $region13: #{tpu_custom_call.1} parent=1 // pred_fallthru
      _
    // Predicated region
    $region14: #{tpu_custom_call.1} parent=1 // pred_check
      _
    $region15: #{tpu_custom_call.1} parent=1 // pred_check_branch
      %36 = sbr.rel (0) target = $region17
    $region16: #{tpu_custom_call.1} parent=1 // pred_region
      _
    $region17: #{tpu_custom_call.1} parent=1 // pred_fallthru
      _
    // Predicated region
    $region18: #{tpu_custom_call.1} parent=1 // pred_check
      _
    $region19: #{tpu_custom_call.1} parent=1 // pred_check_branch
      %38 = sbr.rel (0) target = $region21
    $region20: #{tpu_custom_call.1} parent=1 // pred_region
      _
    $region21: #{tpu_custom_call.1} parent=1 // pred_fallthru
      _
    // Predicated region
    $region22: #{tpu_custom_call.1} parent=1 // pred_check
      _
    $region23: #{tpu_custom_call.1} parent=1 // pred_check_branch
      %40 = sbr.rel (0) target = $region25
    $region24: #{tpu_custom_call.1} parent=1 // pred_region
      _
    $region25: #{tpu_custom_call.1} parent=1 // pred_fallthru
      _
    // Predicated region
    $region26: #{tpu_custom_call.1} parent=1 // pred_check
      _
    $region27: #{tpu_custom_call.1} parent=1 // pred_check_branch
      %42 = sbr.rel (0) target = $region29
    $region28: #{tpu_custom_call.1} parent=1 // pred_region
      %s44 = ssub.s32 15360, 15360
      %45 = vsyncadd [#allocation6], %s44
      %s46 = sshll.u32 [#allocation5], 4
      %s47 = int_to_ptr.vmem [resolvable:$true] %s46
      %52 = dma.hbm_to_vmem [thread:$0]  %s6, 15360, %s47, [#allocation6], 192, 192, 12
    $region29: #{tpu_custom_call.1} parent=1 // pred_fallthru
      _
    // Predicated region
    $region30: #{tpu_custom_call.1} parent=1 // pred_check
      _
    $region31: #{tpu_custom_call.1} parent=1 // pred_check_branch
      %54 = sbr.rel (0) target = $region33
    $region32: #{tpu_custom_call.1} parent=1 // pred_region
      _
    $region33: #{tpu_custom_call.1} parent=1 // pred_fallthru
      _
    // Predicated region
    $region34: #{tpu_custom_call.1} parent=1 // pred_check
      _
    $region35: #{tpu_custom_call.1} parent=1 // pred_check_branch
      %56 = sbr.rel (0) target = $region37
    $region36: #{tpu_custom_call.1} parent=1 // pred_region
      _
    $region37: #{tpu_custom_call.1} parent=1 // pred_fallthru
      _
    // Predicated region
    $region38: #{tpu_custom_call.1} parent=1 // pred_check
      _
    $region39: #{tpu_custom_call.1} parent=1 // pred_check_branch
      %58 = sbr.rel (0) target = $region41
    $region40: #{tpu_custom_call.1} parent=1 // pred_region
      _
    $region41: #{tpu_custom_call.1} parent=1 // pred_fallthru
      _
    // Predicated region
    $region42: #{tpu_custom_call.1} parent=1 // pred_check
      _
    $region43: #{tpu_custom_call.1} parent=1 // pred_check_branch
      %60 = sbr.rel (0) target = $region45
    $region44: #{tpu_custom_call.1} parent=1 // pred_region
      _
    $region45: #{tpu_custom_call.1} parent=1 // pred_fallthru
      _
    // Predicated region
    $region46: #{tpu_custom_call.1} parent=1 // pred_check
      _
    $region47: #{tpu_custom_call.1} parent=1 // pred_check_branch
      %62 = sbr.rel (0) target = $region49
    $region48: #{tpu_custom_call.1} parent=1 // pred_region
      %63 = dma.done [#allocation4], 640
    $region49: #{tpu_custom_call.1} parent=1 // pred_fallthru
      _
    // Predicated region
    $region50: #{tpu_custom_call.1} parent=1 // pred_check
      _
    $region51: #{tpu_custom_call.1} parent=1 // pred_check_branch
      %65 = sbr.rel (0) target = $region53
    $region52: #{tpu_custom_call.1} parent=1 // pred_region
      %66 = dma.done [#allocation6], 15360
    $region53: #{tpu_custom_call.1} parent=1 // pred_fallthru
      _
    %v68 = vld [vmem:[%s0] sm:$0xff]
    %v69 = vpack.c.bf16 %v68, %v68
    %v70 = vld [vmem:[#allocation3] sm:$0xff]
    %v71 = vld [vmem:[#allocation3 + $0x8] sm:$0xff]
    %v72 = vld [vmem:[#allocation3 + $0x10] sm:$0xf]
    %v73 = vld [vmem:[#allocation3 + $0x14] sm:$0xff]
    %v74 = vld [vmem:[#allocation3 + $0x1c] sm:$0xff]
    %v75 = vld [vmem:[#allocation3 + $0x24] sm:$0xf]
    %v76 = vld [vmem:[%s3] sm:$0x1f]
    %v78 = vlaneseq
    %v79 = vshrl.u32 %v78, 7
    %v80 = vsub.s32 0, %v79
    %v81 = vrot.slane %v76, %v80
    %v82 = vlaneseq
    %v83 = vshrl.u32 %v82, 7
    %v84 = vsub.s32 1, %v83
    %v85 = vrot.slane %v76, %v84
    %v86 = vlaneseq
    %v87 = vshrl.u32 %v86, 7
    %v88 = vsub.s32 2, %v87
    %v89 = vrot.slane %v76, %v88
    %v90 = vlaneseq
    %v91 = vshrl.u32 %v90, 7
    %v92 = vsub.s32 3, %v91
    %v93 = vrot.slane %v76, %v92
    %v94 = vlaneseq
    %v95 = vshrl.u32 %v94, 7
    %v96 = vsub.s32 4, %v95
    %v97 = vrot.slane %v76, %v96
    %v109 = vunpack.c.l.b16 %v70
    %v110 = vunpack.c.h.b16 %v70
    %v111 = vunpack.c.l.b16 %v71
    %v112 = vunpack.c.h.b16 %v71
    %v113 = vunpack.c.l.b16 %v72
    %v114 = vunpack.c.l.b16 %v73
    %v115 = vunpack.c.h.b16 %v73
    %v116 = vunpack.c.l.b16 %v74
    %v117 = vunpack.c.h.b16 %v74
    %v118 = vunpack.c.l.b16 %v75
    %v119 = vpack.c.b16 %v114, %v109
    %v120 = vpack.c.b16 %v115, %v110
    %v121 = vpack.c.b16 %v116, %v111
    %v122 = vpack.c.b16 %v117, %v112
    %v123 = vpack.c.b16 %v118, %v113
    %vm129 = vcmask 130048
    %v131 = vsel %vm129, %v69, 0
    %133 = vmatprep.subr.bf16.mxu0 %v120
    %134 = vmatpush1.bf16.msra.mxu0 %v119
    %135 = vmatprep.subr.bf16.mxu0 0
    %136 = vmatpush1.bf16.msra.mxu0 0
    %137 = vmatprep.subr.bf16.mxu0 0
    %138 = vmatpush1.bf16.msra.mxu0 0
    %139 = vmatprep.subr.bf16.mxu0 0
    %140 = vmatpush1.bf16.msra.mxu0 0
    %141 = vmatprep.subr.bf16.mxu0 0
    %142 = vmatpush1.bf16.msra.mxu0 0
    %143 = vmatprep.subr.bf16.mxu0 0
    %144 = vmatpush1.bf16.msra.mxu0 0
    %145 = vmatprep.subr.bf16.mxu0 0
    %146 = vmatpush1.bf16.msra.mxu0 0
    %147 = vmatprep.subr.bf16.mxu0 0
    %148 = vmatpush1.bf16.msra.mxu0 0
    %149 = vmatprep.subr.bf16.mxu0 0
    %150 = vmatpush1.bf16.msra.mxu0 0
    %151 = vmatprep.subr.bf16.mxu0 0
    %152 = vmatpush1.bf16.msra.mxu0 0
    %153 = vmatprep.subr.bf16.mxu0 0
    %154 = vmatpush1.bf16.msra.mxu0 0
    %155 = vmatprep.subr.bf16.mxu0 0
    %156 = vmatpush1.bf16.msra.mxu0 0
    %157 = vmatprep.subr.bf16.mxu0 0
    %158 = vmatpush1.bf16.msra.mxu0 0
    %159 = vmatprep.subr.bf16.mxu0 0
    %160 = vmatpush1.bf16.msra.mxu0 0
    %161 = vmatprep.subr.bf16.mxu0 0
    %162 = vmatpush1.bf16.msra.mxu0 0
    %163 = vmatprep.subr.bf16.mxu0 0
    %164 = vmatpush1.bf16.msra.mxu0 0
    %165 = vmatprep.mubr.bf16.mxu0 0
    %166 = vmatmul.mubr.bf16.gmra.mrb[0].mxu0 %v131
    %v167 = vpop.f32.mrb[0].mxu0
    %v168 = vadd.f32 %v81, %v167
    %v169 = vpop.f32.mrb[0].mxu0
    %v170 = vadd.f32 %v85, %v169
    %v171 = vpop.f32.mrb[0].mxu0
    %v172 = vpop.f32.mrb[0].mxu0
    %173 = vdwg.mxu0
    %174 = vmatprep.subr.bf16.mxu0 %v122
    %175 = vmatpush1.bf16.msra.mxu0 %v121
    %176 = vmatprep.subr.bf16.mxu0 0
    %177 = vmatpush1.bf16.msra.mxu0 0
    %178 = vmatprep.subr.bf16.mxu0 0
    %179 = vmatpush1.bf16.msra.mxu0 0
    %180 = vmatprep.subr.bf16.mxu0 0
    %181 = vmatpush1.bf16.msra.mxu0 0
    %182 = vmatprep.subr.bf16.mxu0 0
    %183 = vmatpush1.bf16.msra.mxu0 0
    %184 = vmatprep.subr.bf16.mxu0 0
    %185 = vmatpush1.bf16.msra.mxu0 0
    %186 = vmatprep.subr.bf16.mxu0 0
    %187 = vmatpush1.bf16.msra.mxu0 0
    %188 = vmatprep.subr.bf16.mxu0 0
    %189 = vmatpush1.bf16.msra.mxu0 0
    %190 = vmatprep.subr.bf16.mxu0 0
    %191 = vmatpush1.bf16.msra.mxu0 0
    %192 = vmatprep.subr.bf16.mxu0 0
    %193 = vmatpush1.bf16.msra.mxu0 0
    %194 = vmatprep.subr.bf16.mxu0 0
    %195 = vmatpush1.bf16.msra.mxu0 0
    %196 = vmatprep.subr.bf16.mxu0 0
    %197 = vmatpush1.bf16.msra.mxu0 0
    %198 = vmatprep.subr.bf16.mxu0 0
    %199 = vmatpush1.bf16.msra.mxu0 0
    %200 = vmatprep.subr.bf16.mxu0 0
    %201 = vmatpush1.bf16.msra.mxu0 0
    %202 = vmatprep.subr.bf16.mxu0 0
    %203 = vmatpush1.bf16.msra.mxu0 0
    %204 = vmatprep.subr.bf16.mxu0 0
    %205 = vmatpush1.bf16.msra.mxu0 0
    %206 = vmatprep.mubr.bf16.mxu0 0
    %207 = vmatmul.mubr.bf16.gmra.mrb[0].mxu0 %v131
    %v208 = vpop.f32.mrb[0].mxu0
    %v209 = vadd.f32 %v89, %v208
    %v210 = vpop.f32.mrb[0].mxu0
    %v211 = vadd.f32 %v93, %v210
    %v212 = vpop.f32.mrb[0].mxu0
    %v213 = vpop.f32.mrb[0].mxu0
    %214 = vdwg.mxu0
    %215 = vmatprep.subr.bf16.mxu0 0
    %216 = vmatpush1.bf16.msra.mxu0 %v123
    %217 = vmatprep.subr.bf16.mxu0 0
    %218 = vmatpush1.bf16.msra.mxu0 0
    %219 = vmatprep.subr.bf16.mxu0 0
    %220 = vmatpush1.bf16.msra.mxu0 0
    %221 = vmatprep.subr.bf16.mxu0 0
    %222 = vmatpush1.bf16.msra.mxu0 0
    %223 = vmatprep.subr.bf16.mxu0 0
    %224 = vmatpush1.bf16.msra.mxu0 0
    %225 = vmatprep.subr.bf16.mxu0 0
    %226 = vmatpush1.bf16.msra.mxu0 0
    %227 = vmatprep.subr.bf16.mxu0 0
    %228 = vmatpush1.bf16.msra.mxu0 0
    %229 = vmatprep.subr.bf16.mxu0 0
    %230 = vmatpush1.bf16.msra.mxu0 0
    %231 = vmatprep.subr.bf16.mxu0 0
    %232 = vmatpush1.bf16.msra.mxu0 0
    %233 = vmatprep.subr.bf16.mxu0 0
    %234 = vmatpush1.bf16.msra.mxu0 0
    %235 = vmatprep.subr.bf16.mxu0 0
    %236 = vmatpush1.bf16.msra.mxu0 0
    %237 = vmatprep.subr.bf16.mxu0 0
    %238 = vmatpush1.bf16.msra.mxu0 0
    %239 = vmatprep.subr.bf16.mxu0 0
    %240 = vmatpush1.bf16.msra.mxu0 0
    %241 = vmatprep.subr.bf16.mxu0 0
    %242 = vmatpush1.bf16.msra.mxu0 0
    %243 = vmatprep.subr.bf16.mxu0 0
    %244 = vmatpush1.bf16.msra.mxu0 0
    %245 = vmatprep.subr.bf16.mxu0 0
    %246 = vmatpush1.bf16.msra.mxu0 0
    %247 = vmatprep.mubr.bf16.mxu0 0
    %248 = vmatmul.mubr.bf16.gmra.mrb[0].mxu0 %v131
    %v249 = vpop.f32.mrb[0].mxu0
    %v250 = vadd.f32 %v97, %v249
    %v251 = vpop.f32.mrb[0].mxu0
    %v252 = vpop.f32.mrb[0].mxu0
    %v253 = vpop.f32.mrb[0].mxu0
    %254 = vdwg.mxu0
    %v255 = vrot.slane %v168, 4
    %v256 = vadd.f32 %v168, %v255
    %v257 = vrot.slane %v256, 2
    %v258 = vadd.f32 %v256, %v257
    %v259 = vrot.slane %v258, 1
    %v260 = vadd.f32 %v258, %v259
    %v261 = vrot.slane %v170, 4
    %v262 = vadd.f32 %v170, %v261
    %v263 = vrot.slane %v262, 2
    %v264 = vadd.f32 %v262, %v263
    %v265 = vrot.slane %v264, 1
    %v266 = vadd.f32 %v264, %v265
    %v267 = vrot.slane %v209, 4
    %v268 = vadd.f32 %v209, %v267
    %v269 = vrot.slane %v268, 2
    %v270 = vadd.f32 %v268, %v269
    %v271 = vrot.slane %v270, 1
    %v272 = vadd.f32 %v270, %v271
    %v273 = vrot.slane %v211, 4
    %v274 = vadd.f32 %v211, %v273
    %v275 = vrot.slane %v274, 2
    %v276 = vadd.f32 %v274, %v275
    %v277 = vrot.slane %v276, 1
    %v278 = vadd.f32 %v276, %v277
    %v279 = vrot.slane %v250, 4
    %v280 = vadd.f32 %v250, %v279
    %v281 = vrot.slane %v280, 2
    %v282 = vadd.f32 %v280, %v281
    %v283 = vrot.slane %v282, 1
    %v284 = vadd.f32 %v282, %v283
    %v285 = vmul.f32 %v260, 0.125
    %v286 = vmul.f32 %v266, 0.125
    %v287 = vmul.f32 %v272, 0.125
    %v288 = vmul.f32 %v278, 0.125
    %v289 = vmul.f32 %v284, 0.125
    %v290 = vmul.f32 %v168, %v168
    %v291 = vmul.f32 %v170, %v170
    %v292 = vmul.f32 %v209, %v209
    %v293 = vmul.f32 %v211, %v211
    %v294 = vmul.f32 %v250, %v250
    %v295 = vrot.slane %v290, 4
    %v296 = vadd.f32 %v290, %v295
    %v297 = vrot.slane %v296, 2
    %v298 = vadd.f32 %v296, %v297
    %v299 = vrot.slane %v298, 1
    %v300 = vadd.f32 %v298, %v299
    %v301 = vrot.slane %v291, 4
    %v302 = vadd.f32 %v291, %v301
    %v303 = vrot.slane %v302, 2
    %v304 = vadd.f32 %v302, %v303
    %v305 = vrot.slane %v304, 1
    %v306 = vadd.f32 %v304, %v305
    %v307 = vrot.slane %v292, 4
    %v308 = vadd.f32 %v292, %v307
    %v309 = vrot.slane %v308, 2
    %v310 = vadd.f32 %v308, %v309
    %v311 = vrot.slane %v310, 1
    %v312 = vadd.f32 %v310, %v311
    %v313 = vrot.slane %v293, 4
    %v314 = vadd.f32 %v293, %v313
    %v315 = vrot.slane %v314, 2
    %v316 = vadd.f32 %v314, %v315
    %v317 = vrot.slane %v316, 1
    %v318 = vadd.f32 %v316, %v317
    %v319 = vrot.slane %v294, 4
    %v320 = vadd.f32 %v294, %v319
    %v321 = vrot.slane %v320, 2
    %v322 = vadd.f32 %v320, %v321
    %v323 = vrot.slane %v322, 1
    %v324 = vadd.f32 %v322, %v323
    %v325 = vmul.f32 %v300, 0.125
    %v326 = vmul.f32 %v306, 0.125
    %v327 = vmul.f32 %v312, 0.125
    %v328 = vmul.f32 %v318, 0.125
    %v329 = vmul.f32 %v324, 0.125
    %v330 = vmul.f32 %v285, %v285
    %v331 = vmul.f32 %v286, %v286
    %v332 = vmul.f32 %v287, %v287
    %v333 = vmul.f32 %v288, %v288
    %v334 = vmul.f32 %v289, %v289
    %v335 = vsub.f32 %v325, %v330
    %v336 = vsub.f32 %v326, %v331
    %v337 = vsub.f32 %v327, %v332
    %v338 = vsub.f32 %v328, %v333
    %v339 = vsub.f32 %v329, %v334
    %v340 = vmax.f32 %v335, 0.0
    %v341 = vmax.f32 %v336, 0.0
    %v342 = vmax.f32 %v337, 0.0
    %v343 = vmax.f32 %v338, 0.0
    %v344 = vmax.f32 %v339, 0.0
    %v345 = vld [vmem:[%s4] sm:$0x1f]
    %v346 = vadd.f32 %v340, 1e-05
    %v347 = vadd.f32 %v341, 1e-05
    %v348 = vadd.f32 %v342, 1e-05
    %v349 = vadd.f32 %v343, 1e-05
    %v350 = vadd.f32 %v344, 1e-05
    %v351 = vrsqrt.pop %v346
    %v352 = vrsqrt.pop %v347
    %v353 = vrsqrt.pop %v348
    %v354 = vrsqrt.pop %v349
    %v355 = vrsqrt.pop %v350
    %v361 = vcombine.low %v351, %v352
    %v362 = vcombine.low %v353, %v354
    %v364 = vunpack.c.l.s4 1966171168
    %v365 = vunpack.c.0.s8 %v364
    %v366 = vlaneseq
    %v367 = vshrl.u32 %v366, 7
    %v368 = vsub.s32 %v365, %v367
    %v369 = vrot.slane %v361, %v368
    %v371 = vunpack.c.l.s4 1966171168
    %v372 = vunpack.c.0.s8 %v371
    %v373 = vlaneseq
    %v374 = vshrl.u32 %v373, 7
    %v375 = vsub.s32 %v372, %v374
    %v376 = vrot.slane %v362, %v375
    %v378 = vunpack.c.l.s4 1966171168
    %v379 = vunpack.c.0.s8 %v378
    %v380 = vlaneseq
    %v381 = vshrl.u32 %v380, 7
    %v382 = vsub.s32 %v379, %v381
    %v383 = vrot.slane %v355, %v382
    %v384 = vcombine.low %v369, %v376
    %v386 = vunpack.c.l.s4 1966171168
    %v387 = vunpack.c.0.s8 %v386
    %v388 = vlaneseq
    %v389 = vshrl.u32 %v388, 7
    %v390 = vsub.s32 %v387, %v389
    %v391 = vrot.slane %v384, %v390
    %v393 = vunpack.c.l.s4 1966171168
    %v394 = vunpack.c.0.s8 %v393
    %v395 = vlaneseq
    %v396 = vshrl.u32 %v395, 7
    %v397 = vsub.s32 %v394, %v396
    %v398 = vrot.slane %v383, %v397
    %v399 = vcombine.low %v391, %v398
    %v401 = vmul.f32 %v345, %v399
    %v402 = vld [vmem:[%s5] sm:$0x1f]
    %v404 = vlaneseq
    %v405 = vshrl.u32 %v404, 7
    %v406 = vsub.s32 0, %v405
    %v407 = vrot.slane %v401, %v406
    %v408 = vlaneseq
    %v409 = vshrl.u32 %v408, 7
    %v410 = vsub.s32 1, %v409
    %v411 = vrot.slane %v401, %v410
    %v412 = vlaneseq
    %v413 = vshrl.u32 %v412, 7
    %v414 = vsub.s32 2, %v413
    %v415 = vrot.slane %v401, %v414
    %v416 = vlaneseq
    %v417 = vshrl.u32 %v416, 7
    %v418 = vsub.s32 3, %v417
    %v419 = vrot.slane %v401, %v418
    %v420 = vlaneseq
    %v421 = vshrl.u32 %v420, 7
    %v422 = vsub.s32 4, %v421
    %v423 = vrot.slane %v401, %v422
    %v429 = vmul.f32 %v285, %v407
    %v430 = vmul.f32 %v286, %v411
    %v431 = vmul.f32 %v287, %v415
    %v432 = vmul.f32 %v288, %v419
    %v433 = vmul.f32 %v289, %v423
    %v439 = vcombine.low %v429, %v430
    %v440 = vcombine.low %v431, %v432
    %v442 = vunpack.c.l.s4 1966171168
    %v443 = vunpack.c.0.s8 %v442
    %v444 = vlaneseq
    %v445 = vshrl.u32 %v444, 7
    %v446 = vsub.s32 %v443, %v445
    %v447 = vrot.slane %v439, %v446
    %v449 = vunpack.c.l.s4 1966171168
    %v450 = vunpack.c.0.s8 %v449
    %v451 = vlaneseq
    %v452 = vshrl.u32 %v451, 7
    %v453 = vsub.s32 %v450, %v452
    %v454 = vrot.slane %v440, %v453
    %v456 = vunpack.c.l.s4 1966171168
    %v457 = vunpack.c.0.s8 %v456
    %v458 = vlaneseq
    %v459 = vshrl.u32 %v458, 7
    %v460 = vsub.s32 %v457, %v459
    %v461 = vrot.slane %v433, %v460
    %v462 = vcombine.low %v447, %v454
    %v464 = vunpack.c.l.s4 1966171168
    %v465 = vunpack.c.0.s8 %v464
    %v466 = vlaneseq
    %v467 = vshrl.u32 %v466, 7
    %v468 = vsub.s32 %v465, %v467
    %v469 = vrot.slane %v462, %v468
    %v471 = vunpack.c.l.s4 1966171168
    %v472 = vunpack.c.0.s8 %v471
    %v473 = vlaneseq
    %v474 = vshrl.u32 %v473, 7
    %v475 = vsub.s32 %v472, %v474
    %v476 = vrot.slane %v461, %v475
    %v477 = vcombine.low %v469, %v476
    %v479 = vsub.f32 %v402, %v477
    %v480 = vmul.f32 %v168, %v407
    %v481 = vmul.f32 %v170, %v411
    %v482 = vmul.f32 %v209, %v415
    %v483 = vmul.f32 %v211, %v419
    %v484 = vmul.f32 %v250, %v423
    %v486 = vlaneseq
    %v487 = vshrl.u32 %v486, 7
    %v488 = vsub.s32 0, %v487
    %v489 = vrot.slane %v479, %v488
    %v490 = vlaneseq
    %v491 = vshrl.u32 %v490, 7
    %v492 = vsub.s32 1, %v491
    %v493 = vrot.slane %v479, %v492
    %v494 = vlaneseq
    %v495 = vshrl.u32 %v494, 7
    %v496 = vsub.s32 2, %v495
    %v497 = vrot.slane %v479, %v496
    %v498 = vlaneseq
    %v499 = vshrl.u32 %v498, 7
    %v500 = vsub.s32 3, %v499
    %v501 = vrot.slane %v479, %v500
    %v502 = vlaneseq
    %v503 = vshrl.u32 %v502, 7
    %v504 = vsub.s32 4, %v503
    %v505 = vrot.slane %v479, %v504
    %v511 = vadd.f32 %v480, %v489
    %v512 = vadd.f32 %v481, %v493
    %v513 = vadd.f32 %v482, %v497
    %v514 = vadd.f32 %v483, %v501
    %v515 = vadd.f32 %v484, %v505
    %v516 = vmax.f32 %v511, 0.0
    %v517 = vmax.f32 %v512, 0.0
    %v518 = vmax.f32 %v513, 0.0
    %v519 = vmax.f32 %v514, 0.0
    %v520 = vmax.f32 %v515, 0.0
    %v521 = vpack.c.bf16 %v516, %v516
    %v522 = vpack.c.bf16 %v517, %v517
    %v523 = vpack.c.bf16 %v518, %v518
    %v524 = vpack.c.bf16 %v519, %v519
    %v525 = vpack.c.bf16 %v520, %v520
    %v526 = vld [vmem:[#allocation5] sm:$0xff]
    %v527 = vld [vmem:[#allocation5 + $0x8] sm:$0xf]
    %v528 = vld [vmem:[#allocation5 + $0xc] sm:$0xff]
    %v529 = vld [vmem:[#allocation5 + $0x14] sm:$0xf]
    %v530 = vld [vmem:[#allocation5 + $0x18] sm:$0xff]
    %v531 = vld [vmem:[#allocation5 + $0x20] sm:$0xf]
    %v532 = vld [vmem:[#allocation5 + $0x24] sm:$0xff]
    %v533 = vld [vmem:[#allocation5 + $0x2c] sm:$0xf]
    %v534 = vld [vmem:[#allocation5 + $0x30] sm:$0xff]
    %v535 = vld [vmem:[#allocation5 + $0x38] sm:$0xf]
    %v536 = vld [vmem:[#allocation5 + $0x3c] sm:$0xff]
    %v537 = vld [vmem:[#allocation5 + $0x44] sm:$0xf]
    %v538 = vld [vmem:[#allocation5 + $0x48] sm:$0xff]
    %v539 = vld [vmem:[#allocation5 + $0x50] sm:$0xf]
    %v540 = vld [vmem:[#allocation5 + $0x54] sm:$0xff]
    %v541 = vld [vmem:[#allocation5 + $0x5c] sm:$0xf]
    %v542 = vld [vmem:[#allocation5 + $0x60] sm:$0xff]
    %v543 = vld [vmem:[#allocation5 + $0x68] sm:$0xf]
    %v544 = vld [vmem:[#allocation5 + $0x6c] sm:$0xff]
    %v545 = vld [vmem:[#allocation5 + $0x74] sm:$0xf]
    %v546 = vld [vmem:[#allocation5 + $0x78] sm:$0xff]
    %v547 = vld [vmem:[#allocation5 + $0x80] sm:$0xf]
    %v548 = vld [vmem:[#allocation5 + $0x84] sm:$0xff]
    %v549 = vld [vmem:[#allocation5 + $0x8c] sm:$0xf]
    %v550 = vld [vmem:[#allocation5 + $0x90] sm:$0xff]
    %v551 = vld [vmem:[#allocation5 + $0x98] sm:$0xf]
    %v552 = vld [vmem:[#allocation5 + $0x9c] sm:$0xff]
    %v553 = vld [vmem:[#allocation5 + $0xa4] sm:$0xf]
    %v554 = vld [vmem:[#allocation5 + $0xa8] sm:$0xff]
    %v555 = vld [vmem:[#allocation5 + $0xb0] sm:$0xf]
    %v556 = vld [vmem:[#allocation5 + $0xb4] sm:$0xff]
    %v557 = vld [vmem:[#allocation5 + $0xbc] sm:$0xf]
    %v558 = vld [vmem:[#allocation5 + $0xc0] sm:$0xff]
    %v559 = vld [vmem:[#allocation5 + $0xc8] sm:$0xf]
    %v560 = vld [vmem:[#allocation5 + $0xcc] sm:$0xff]
    %v561 = vld [vmem:[#allocation5 + $0xd4] sm:$0xf]
    %v562 = vld [vmem:[#allocation5 + $0xd8] sm:$0xff]
    %v563 = vld [vmem:[#allocation5 + $0xe0] sm:$0xf]
    %v564 = vld [vmem:[#allocation5 + $0xe4] sm:$0xff]
    %v565 = vld [vmem:[#allocation5 + $0xec] sm:$0xf]
    %v566 = vld [vmem:[#allocation5 + $0xf0] sm:$0xff]
    %v567 = vld [vmem:[#allocation5 + $0xf8] sm:$0xf]
    %v568 = vld [vmem:[#allocation5 + $0xfc] sm:$0xff]
    %v569 = vld [vmem:[#allocation5 + $0x104] sm:$0xf]
    %v570 = vld [vmem:[#allocation5 + $0x108] sm:$0xff]
    %v571 = vld [vmem:[#allocation5 + $0x110] sm:$0xf]
    %v572 = vld [vmem:[#allocation5 + $0x114] sm:$0xff]
    %v573 = vld [vmem:[#allocation5 + $0x11c] sm:$0xf]
    %v574 = vld [vmem:[#allocation5 + $0x120] sm:$0xff]
    %v575 = vld [vmem:[#allocation5 + $0x128] sm:$0xf]
    %v576 = vld [vmem:[#allocation5 + $0x12c] sm:$0xff]
    %v577 = vld [vmem:[#allocation5 + $0x134] sm:$0xf]
    %v578 = vld [vmem:[#allocation5 + $0x138] sm:$0xff]
    %v579 = vld [vmem:[#allocation5 + $0x140] sm:$0xf]
    %v580 = vld [vmem:[#allocation5 + $0x144] sm:$0xff]
    %v581 = vld [vmem:[#allocation5 + $0x14c] sm:$0xf]
    %v582 = vld [vmem:[#allocation5 + $0x150] sm:$0xff]
    %v583 = vld [vmem:[#allocation5 + $0x158] sm:$0xf]
    %v584 = vld [vmem:[#allocation5 + $0x15c] sm:$0xff]
    %v585 = vld [vmem:[#allocation5 + $0x164] sm:$0xf]
    %v586 = vld [vmem:[#allocation5 + $0x168] sm:$0xff]
    %v587 = vld [vmem:[#allocation5 + $0x170] sm:$0xf]
    %v588 = vld [vmem:[#allocation5 + $0x174] sm:$0xff]
    %v589 = vld [vmem:[#allocation5 + $0x17c] sm:$0xf]
    %v590 = vld [vmem:[#allocation5 + $0x180] sm:$0xff]
    %v591 = vld [vmem:[#allocation5 + $0x188] sm:$0xf]
    %v592 = vld [vmem:[#allocation5 + $0x18c] sm:$0xff]
    %v593 = vld [vmem:[#allocation5 + $0x194] sm:$0xf]
    %v594 = vld [vmem:[#allocation5 + $0x198] sm:$0xff]
    %v595 = vld [vmem:[#allocation5 + $0x1a0] sm:$0xf]
    %v596 = vld [vmem:[#allocation5 + $0x1a4] sm:$0xff]
    %v597 = vld [vmem:[#allocation5 + $0x1ac] sm:$0xf]
    %v598 = vld [vmem:[#allocation5 + $0x1b0] sm:$0xff]
    %v599 = vld [vmem:[#allocation5 + $0x1b8] sm:$0xf]
    %v600 = vld [vmem:[#allocation5 + $0x1bc] sm:$0xff]
    %v601 = vld [vmem:[#allocation5 + $0x1c4] sm:$0xf]
    %v602 = vld [vmem:[#allocation5 + $0x1c8] sm:$0xff]
    %v603 = vld [vmem:[#allocation5 + $0x1d0] sm:$0xf]
    %v604 = vld [vmem:[#allocation5 + $0x1d4] sm:$0xff]
    %v605 = vld [vmem:[#allocation5 + $0x1dc] sm:$0xf]
    %v606 = vld [vmem:[#allocation5 + $0x1e0] sm:$0xff]
    %v607 = vld [vmem:[#allocation5 + $0x1e8] sm:$0xf]
    %v608 = vld [vmem:[#allocation5 + $0x1ec] sm:$0xff]
    %v609 = vld [vmem:[#allocation5 + $0x1f4] sm:$0xf]
    %v610 = vld [vmem:[#allocation5 + $0x1f8] sm:$0xff]
    %v611 = vld [vmem:[#allocation5 + $0x200] sm:$0xf]
    %v612 = vld [vmem:[#allocation5 + $0x204] sm:$0xff]
    %v613 = vld [vmem:[#allocation5 + $0x20c] sm:$0xf]
    %v614 = vld [vmem:[#allocation5 + $0x210] sm:$0xff]
    %v615 = vld [vmem:[#allocation5 + $0x218] sm:$0xf]
    %v616 = vld [vmem:[#allocation5 + $0x21c] sm:$0xff]
    %v617 = vld [vmem:[#allocation5 + $0x224] sm:$0xf]
    %v618 = vld [vmem:[#allocation5 + $0x228] sm:$0xff]
    %v619 = vld [vmem:[#allocation5 + $0x230] sm:$0xf]
    %v620 = vld [vmem:[#allocation5 + $0x234] sm:$0xff]
    %v621 = vld [vmem:[#allocation5 + $0x23c] sm:$0xf]
    %v622 = vld [vmem:[#allocation5 + $0x240] sm:$0xff]
    %v623 = vld [vmem:[#allocation5 + $0x248] sm:$0xf]
    %v624 = vld [vmem:[#allocation5 + $0x24c] sm:$0xff]
    %v625 = vld [vmem:[#allocation5 + $0x254] sm:$0xf]
    %v626 = vld [vmem:[#allocation5 + $0x258] sm:$0xff]
    %v627 = vld [vmem:[#allocation5 + $0x260] sm:$0xf]
    %v628 = vld [vmem:[#allocation5 + $0x264] sm:$0xff]
    %v629 = vld [vmem:[#allocation5 + $0x26c] sm:$0xf]
    %v630 = vld [vmem:[#allocation5 + $0x270] sm:$0xff]
    %v631 = vld [vmem:[#allocation5 + $0x278] sm:$0xf]
    %v632 = vld [vmem:[#allocation5 + $0x27c] sm:$0xff]
    %v633 = vld [vmem:[#allocation5 + $0x284] sm:$0xf]
    %v634 = vld [vmem:[#allocation5 + $0x288] sm:$0xff]
    %v635 = vld [vmem:[#allocation5 + $0x290] sm:$0xf]
    %v636 = vld [vmem:[#allocation5 + $0x294] sm:$0xff]
    %v637 = vld [vmem:[#allocation5 + $0x29c] sm:$0xf]
    %v638 = vld [vmem:[#allocation5 + $0x2a0] sm:$0xff]
    %v639 = vld [vmem:[#allocation5 + $0x2a8] sm:$0xf]
    %v640 = vld [vmem:[#allocation5 + $0x2ac] sm:$0xff]
    %v641 = vld [vmem:[#allocation5 + $0x2b4] sm:$0xf]
    %v642 = vld [vmem:[#allocation5 + $0x2b8] sm:$0xff]
    %v643 = vld [vmem:[#allocation5 + $0x2c0] sm:$0xf]
    %v644 = vld [vmem:[#allocation5 + $0x2c4] sm:$0xff]
    %v645 = vld [vmem:[#allocation5 + $0x2cc] sm:$0xf]
    %v646 = vld [vmem:[#allocation5 + $0x2d0] sm:$0xff]
    %v647 = vld [vmem:[#allocation5 + $0x2d8] sm:$0xf]
    %v648 = vld [vmem:[#allocation5 + $0x2dc] sm:$0xff]
    %v649 = vld [vmem:[#allocation5 + $0x2e4] sm:$0xf]
    %v650 = vld [vmem:[#allocation5 + $0x2e8] sm:$0xff]
    %v651 = vld [vmem:[#allocation5 + $0x2f0] sm:$0xf]
    %v652 = vld [vmem:[#allocation5 + $0x2f4] sm:$0xff]
    %v653 = vld [vmem:[#allocation5 + $0x2fc] sm:$0xf]
    %v654 = vld [vmem:[#allocation5 + $0x300] sm:$0xff]
    %v655 = vld [vmem:[#allocation5 + $0x308] sm:$0xf]
    %v656 = vld [vmem:[#allocation5 + $0x30c] sm:$0xff]
    %v657 = vld [vmem:[#allocation5 + $0x314] sm:$0xf]
    %v658 = vld [vmem:[#allocation5 + $0x318] sm:$0xff]
    %v659 = vld [vmem:[#allocation5 + $0x320] sm:$0xf]
    %v660 = vld [vmem:[#allocation5 + $0x324] sm:$0xff]
    %v661 = vld [vmem:[#allocation5 + $0x32c] sm:$0xf]
    %v662 = vld [vmem:[#allocation5 + $0x330] sm:$0xff]
    %v663 = vld [vmem:[#allocation5 + $0x338] sm:$0xf]
    %v664 = vld [vmem:[#allocation5 + $0x33c] sm:$0xff]
    %v665 = vld [vmem:[#allocation5 + $0x344] sm:$0xf]
    %v666 = vld [vmem:[#allocation5 + $0x348] sm:$0xff]
    %v667 = vld [vmem:[#allocation5 + $0x350] sm:$0xf]
    %v668 = vld [vmem:[#allocation5 + $0x354] sm:$0xff]
    %v669 = vld [vmem:[#allocation5 + $0x35c] sm:$0xf]
    %v670 = vld [vmem:[#allocation5 + $0x360] sm:$0xff]
    %v671 = vld [vmem:[#allocation5 + $0x368] sm:$0xf]
    %v672 = vld [vmem:[#allocation5 + $0x36c] sm:$0xff]
    %v673 = vld [vmem:[#allocation5 + $0x374] sm:$0xf]
    %v674 = vld [vmem:[#allocation5 + $0x378] sm:$0xff]
    %v675 = vld [vmem:[#allocation5 + $0x380] sm:$0xf]
    %v676 = vld [vmem:[#allocation5 + $0x384] sm:$0xff]
    %v677 = vld [vmem:[#allocation5 + $0x38c] sm:$0xf]
    %v678 = vld [vmem:[#allocation5 + $0x390] sm:$0xff]
    %v679 = vld [vmem:[#allocation5 + $0x398] sm:$0xf]
    %v680 = vld [vmem:[#allocation5 + $0x39c] sm:$0xff]
    %v681 = vld [vmem:[#allocation5 + $0x3a4] sm:$0xf]
    %v682 = vld [vmem:[#allocation5 + $0x3a8] sm:$0xff]
    %v683 = vld [vmem:[#allocation5 + $0x3b0] sm:$0xf]
    %v684 = vld [vmem:[#allocation5 + $0x3b4] sm:$0xff]
    %v685 = vld [vmem:[#allocation5 + $0x3bc] sm:$0xf]
    %v686 = vld [vmem:[%s1] sm:$0xff]
    %v687 = vpack.c.bf16 %v686, %v686
    %v688 = vld [vmem:[%s8] sm:$0x3f]
    %v690 = vcombine.high %v688, %v688
    %v692 = vunpack.c.l.s4 1983009808
    %v693 = vunpack.c.0.s8 %v692
    %v694 = vlaneseq
    %v695 = vshrl.u32 %v694, 7
    %v696 = vsub.s32 %v693, %v695
    %v697 = vrot.slane %v688, %v696
    %v699 = vunpack.c.l.s4 1983009808
    %v700 = vunpack.c.0.s8 %v699
    %v701 = vlaneseq
    %v702 = vshrl.u32 %v701, 7
    %v703 = vsub.s32 %v700, %v702
    %v704 = vrot.slane %v690, %v703
    %v705 = vcombine.high %v697, %v697
    %vm706 = vcmask 31744
    %v708 = vsel %vm706, %v687, 0
    %vm710 = vcmask 1041408
    %v712 = vsel %vm710, %v697, 0
    %v715 = vsel %vm710, %v705, 0
    %v718 = vsel %vm710, %v704, 0
    %720 = vmatprep.subr.bf16.mxu0 %v715
    %721 = vmatpush1.bf16.msra.mxu0 %v712
    %722 = vmatprep.subr.bf16.mxu0 0
    %723 = vmatpush1.bf16.msra.mxu0 0
    %724 = vmatprep.subr.bf16.mxu0 0
    %725 = vmatpush1.bf16.msra.mxu0 0
    %726 = vmatprep.subr.bf16.mxu0 0
    %727 = vmatpush1.bf16.msra.mxu0 0
    %728 = vmatprep.subr.bf16.mxu0 0
    %729 = vmatpush1.bf16.msra.mxu0 0
    %730 = vmatprep.subr.bf16.mxu0 0
    %731 = vmatpush1.bf16.msra.mxu0 0
    %732 = vmatprep.subr.bf16.mxu0 0
    %733 = vmatpush1.bf16.msra.mxu0 0
    %734 = vmatprep.subr.bf16.mxu0 0
    %735 = vmatpush1.bf16.msra.mxu0 0
    %736 = vmatprep.subr.bf16.mxu0 0
    %737 = vmatpush1.bf16.msra.mxu0 0
    %738 = vmatprep.subr.bf16.mxu0 0
    %739 = vmatpush1.bf16.msra.mxu0 0
    %740 = vmatprep.subr.bf16.mxu0 0
    %741 = vmatpush1.bf16.msra.mxu0 0
    %742 = vmatprep.subr.bf16.mxu0 0
    %743 = vmatpush1.bf16.msra.mxu0 0
    %744 = vmatprep.subr.bf16.mxu0 0
    %745 = vmatpush1.bf16.msra.mxu0 0
    %746 = vmatprep.subr.bf16.mxu0 0
    %747 = vmatpush1.bf16.msra.mxu0 0
    %748 = vmatprep.subr.bf16.mxu0 0
    %749 = vmatpush1.bf16.msra.mxu0 0
    %750 = vmatprep.subr.bf16.mxu0 0
    %751 = vmatpush1.bf16.msra.mxu0 0
    %752 = vmatprep.mubr.bf16.mxu0 0
    %753 = vmatmul.mubr.bf16.gmra.mrb[0].mxu0 %v708
    %v754 = vpop.f32.mrb[0].mxu0
    %v755 = vadd.f32 0.0, %v754
    %v756 = vpop.f32.mrb[0].mxu0
    %v757 = vadd.f32 0.0, %v756
    %v758 = vpop.f32.mrb[0].mxu0
    %v759 = vpop.f32.mrb[0].mxu0
    %760 = vdwg.mxu0
    %761 = vmatprep.subr.bf16.mxu0 0
    %762 = vmatpush1.bf16.msra.mxu0 %v718
    %763 = vmatprep.subr.bf16.mxu0 0
    %764 = vmatpush1.bf16.msra.mxu0 0
    %765 = vmatprep.subr.bf16.mxu0 0
    %766 = vmatpush1.bf16.msra.mxu0 0
    %767 = vmatprep.subr.bf16.mxu0 0
    %768 = vmatpush1.bf16.msra.mxu0 0
    %769 = vmatprep.subr.bf16.mxu0 0
    %770 = vmatpush1.bf16.msra.mxu0 0
    %771 = vmatprep.subr.bf16.mxu0 0
    %772 = vmatpush1.bf16.msra.mxu0 0
    %773 = vmatprep.subr.bf16.mxu0 0
    %774 = vmatpush1.bf16.msra.mxu0 0
    %775 = vmatprep.subr.bf16.mxu0 0
    %776 = vmatpush1.bf16.msra.mxu0 0
    %777 = vmatprep.subr.bf16.mxu0 0
    %778 = vmatpush1.bf16.msra.mxu0 0
    %779 = vmatprep.subr.bf16.mxu0 0
    %780 = vmatpush1.bf16.msra.mxu0 0
    %781 = vmatprep.subr.bf16.mxu0 0
    %782 = vmatpush1.bf16.msra.mxu0 0
    %783 = vmatprep.subr.bf16.mxu0 0
    %784 = vmatpush1.bf16.msra.mxu0 0
    %785 = vmatprep.subr.bf16.mxu0 0
    %786 = vmatpush1.bf16.msra.mxu0 0
    %787 = vmatprep.subr.bf16.mxu0 0
    %788 = vmatpush1.bf16.msra.mxu0 0
    %789 = vmatprep.subr.bf16.mxu0 0
    %790 = vmatpush1.bf16.msra.mxu0 0
    %791 = vmatprep.subr.bf16.mxu0 0
    %792 = vmatpush1.bf16.msra.mxu0 0
    %793 = vmatprep.mubr.bf16.mxu0 0
    %794 = vmatmul.mubr.bf16.gmra.mrb[0].mxu0 %v708
    %v795 = vpop.f32.mrb[0].mxu0
    %v796 = vadd.f32 0.0, %v795
    %v797 = vpop.f32.mrb[0].mxu0
    %v798 = vpop.f32.mrb[0].mxu0
    %v799 = vpop.f32.mrb[0].mxu0
    %800 = vdwg.mxu0
    %v961 = vunpack.c.l.b16 %v526
    %v962 = vunpack.c.h.b16 %v526
    %v963 = vunpack.c.l.b16 %v527
    %v964 = vunpack.c.l.b16 %v528
    %v965 = vunpack.c.h.b16 %v528
    %v966 = vunpack.c.l.b16 %v529
    %v967 = vunpack.c.l.b16 %v530
    %v968 = vunpack.c.h.b16 %v530
    %v969 = vunpack.c.l.b16 %v531
    %v970 = vunpack.c.l.b16 %v532
    %v971 = vunpack.c.h.b16 %v532
    %v972 = vunpack.c.l.b16 %v533
    %v973 = vunpack.c.l.b16 %v534
    %v974 = vunpack.c.h.b16 %v534
    %v975 = vunpack.c.l.b16 %v535
    %v976 = vunpack.c.l.b16 %v536
    %v977 = vunpack.c.h.b16 %v536
    %v978 = vunpack.c.l.b16 %v537
    %v979 = vunpack.c.l.b16 %v538
    %v980 = vunpack.c.h.b16 %v538
    %v981 = vunpack.c.l.b16 %v539
    %v982 = vunpack.c.l.b16 %v540
    %v983 = vunpack.c.h.b16 %v540
    %v984 = vunpack.c.l.b16 %v541
    %v985 = vunpack.c.l.b16 %v542
    %v986 = vunpack.c.h.b16 %v542
    %v987 = vunpack.c.l.b16 %v543
    %v988 = vunpack.c.l.b16 %v544
    %v989 = vunpack.c.h.b16 %v544
    %v990 = vunpack.c.l.b16 %v545
    %v991 = vunpack.c.l.b16 %v546
    %v992 = vunpack.c.h.b16 %v546
    %v993 = vunpack.c.l.b16 %v547
    %v994 = vunpack.c.l.b16 %v548
    %v995 = vunpack.c.h.b16 %v548
    %v996 = vunpack.c.l.b16 %v549
    %v997 = vunpack.c.l.b16 %v550
    %v998 = vunpack.c.h.b16 %v550
    %v999 = vunpack.c.l.b16 %v551
    %v1000 = vunpack.c.l.b16 %v552
    %v1001 = vunpack.c.h.b16 %v552
    %v1002 = vunpack.c.l.b16 %v553
    %v1003 = vunpack.c.l.b16 %v554
    %v1004 = vunpack.c.h.b16 %v554
    %v1005 = vunpack.c.l.b16 %v555
    %v1006 = vunpack.c.l.b16 %v556
    %v1007 = vunpack.c.h.b16 %v556
    %v1008 = vunpack.c.l.b16 %v557
    %v1009 = vunpack.c.l.b16 %v558
    %v1010 = vunpack.c.h.b16 %v558
    %v1011 = vunpack.c.l.b16 %v559
    %v1012 = vunpack.c.l.b16 %v560
    %v1013 = vunpack.c.h.b16 %v560
    %v1014 = vunpack.c.l.b16 %v561
    %v1015 = vunpack.c.l.b16 %v562
    %v1016 = vunpack.c.h.b16 %v562
    %v1017 = vunpack.c.l.b16 %v563
    %v1018 = vunpack.c.l.b16 %v564
    %v1019 = vunpack.c.h.b16 %v564
    %v1020 = vunpack.c.l.b16 %v565
    %v1021 = vunpack.c.l.b16 %v566
    %v1022 = vunpack.c.h.b16 %v566
    %v1023 = vunpack.c.l.b16 %v567
    %v1024 = vunpack.c.l.b16 %v568
    %v1025 = vunpack.c.h.b16 %v568
    %v1026 = vunpack.c.l.b16 %v569
    %v1027 = vunpack.c.l.b16 %v570
    %v1028 = vunpack.c.h.b16 %v570
    %v1029 = vunpack.c.l.b16 %v571
    %v1030 = vunpack.c.l.b16 %v572
    %v1031 = vunpack.c.h.b16 %v572
    %v1032 = vunpack.c.l.b16 %v573
    %v1033 = vunpack.c.l.b16 %v574
    %v1034 = vunpack.c.h.b16 %v574
    %v1035 = vunpack.c.l.b16 %v575
    %v1036 = vunpack.c.l.b16 %v576
    %v1037 = vunpack.c.h.b16 %v576
    %v1038 = vunpack.c.l.b16 %v577
    %v1039 = vunpack.c.l.b16 %v578
    %v1040 = vunpack.c.h.b16 %v578
    %v1041 = vunpack.c.l.b16 %v579
    %v1042 = vunpack.c.l.b16 %v580
    %v1043 = vunpack.c.h.b16 %v580
    %v1044 = vunpack.c.l.b16 %v581
    %v1045 = vunpack.c.l.b16 %v582
    %v1046 = vunpack.c.h.b16 %v582
    %v1047 = vunpack.c.l.b16 %v583
    %v1048 = vunpack.c.l.b16 %v584
    %v1049 = vunpack.c.h.b16 %v584
    %v1050 = vunpack.c.l.b16 %v585
    %v1051 = vunpack.c.l.b16 %v586
    %v1052 = vunpack.c.h.b16 %v586
    %v1053 = vunpack.c.l.b16 %v587
    %v1054 = vunpack.c.l.b16 %v588
    %v1055 = vunpack.c.h.b16 %v588
    %v1056 = vunpack.c.l.b16 %v589
    %v1057 = vunpack.c.l.b16 %v590
    %v1058 = vunpack.c.h.b16 %v590
    %v1059 = vunpack.c.l.b16 %v591
    %v1060 = vunpack.c.l.b16 %v592
    %v1061 = vunpack.c.h.b16 %v592
    %v1062 = vunpack.c.l.b16 %v593
    %v1063 = vunpack.c.l.b16 %v594
    %v1064 = vunpack.c.h.b16 %v594
    %v1065 = vunpack.c.l.b16 %v595
    %v1066 = vunpack.c.l.b16 %v596
    %v1067 = vunpack.c.h.b16 %v596
    %v1068 = vunpack.c.l.b16 %v597
    %v1069 = vunpack.c.l.b16 %v598
    %v1070 = vunpack.c.h.b16 %v598
    %v1071 = vunpack.c.l.b16 %v599
    %v1072 = vunpack.c.l.b16 %v600
    %v1073 = vunpack.c.h.b16 %v600
    %v1074 = vunpack.c.l.b16 %v601
    %v1075 = vunpack.c.l.b16 %v602
    %v1076 = vunpack.c.h.b16 %v602
    %v1077 = vunpack.c.l.b16 %v603
    %v1078 = vunpack.c.l.b16 %v604
    %v1079 = vunpack.c.h.b16 %v604
    %v1080 = vunpack.c.l.b16 %v605
    %v1081 = vunpack.c.l.b16 %v606
    %v1082 = vunpack.c.h.b16 %v606
    %v1083 = vunpack.c.l.b16 %v607
    %v1084 = vunpack.c.l.b16 %v608
    %v1085 = vunpack.c.h.b16 %v608
    %v1086 = vunpack.c.l.b16 %v609
    %v1087 = vunpack.c.l.b16 %v610
    %v1088 = vunpack.c.h.b16 %v610
    %v1089 = vunpack.c.l.b16 %v611
    %v1090 = vunpack.c.l.b16 %v612
    %v1091 = vunpack.c.h.b16 %v612
    %v1092 = vunpack.c.l.b16 %v613
    %v1093 = vunpack.c.l.b16 %v614
    %v1094 = vunpack.c.h.b16 %v614
    %v1095 = vunpack.c.l.b16 %v615
    %v1096 = vunpack.c.l.b16 %v616
    %v1097 = vunpack.c.h.b16 %v616
    %v1098 = vunpack.c.l.b16 %v617
    %v1099 = vunpack.c.l.b16 %v618
    %v1100 = vunpack.c.h.b16 %v618
    %v1101 = vunpack.c.l.b16 %v619
    %v1102 = vunpack.c.l.b16 %v620
    %v1103 = vunpack.c.h.b16 %v620
    %v1104 = vunpack.c.l.b16 %v621
    %v1105 = vunpack.c.l.b16 %v622
    %v1106 = vunpack.c.h.b16 %v622
    %v1107 = vunpack.c.l.b16 %v623
    %v1108 = vunpack.c.l.b16 %v624
    %v1109 = vunpack.c.h.b16 %v624
    %v1110 = vunpack.c.l.b16 %v625
    %v1111 = vunpack.c.l.b16 %v626
    %v1112 = vunpack.c.h.b16 %v626
    %v1113 = vunpack.c.l.b16 %v627
    %v1114 = vunpack.c.l.b16 %v628
    %v1115 = vunpack.c.h.b16 %v628
    %v1116 = vunpack.c.l.b16 %v629
    %v1117 = vunpack.c.l.b16 %v630
    %v1118 = vunpack.c.h.b16 %v630
    %v1119 = vunpack.c.l.b16 %v631
    %v1120 = vunpack.c.l.b16 %v632
    %v1121 = vunpack.c.h.b16 %v632
    %v1122 = vunpack.c.l.b16 %v633
    %v1123 = vunpack.c.l.b16 %v634
    %v1124 = vunpack.c.h.b16 %v634
    %v1125 = vunpack.c.l.b16 %v635
    %v1126 = vunpack.c.l.b16 %v636
    %v1127 = vunpack.c.h.b16 %v636
    %v1128 = vunpack.c.l.b16 %v637
    %v1129 = vunpack.c.l.b16 %v638
    %v1130 = vunpack.c.h.b16 %v638
    %v1131 = vunpack.c.l.b16 %v639
    %v1132 = vunpack.c.l.b16 %v640
    %v1133 = vunpack.c.h.b16 %v640
    %v1134 = vunpack.c.l.b16 %v641
    %v1135 = vunpack.c.l.b16 %v642
    %v1136 = vunpack.c.h.b16 %v642
    %v1137 = vunpack.c.l.b16 %v643
    %v1138 = vunpack.c.l.b16 %v644
    %v1139 = vunpack.c.h.b16 %v644
    %v1140 = vunpack.c.l.b16 %v645
    %v1141 = vunpack.c.l.b16 %v646
    %v1142 = vunpack.c.h.b16 %v646
    %v1143 = vunpack.c.l.b16 %v647
    %v1144 = vunpack.c.l.b16 %v648
    %v1145 = vunpack.c.h.b16 %v648
    %v1146 = vunpack.c.l.b16 %v649
    %v1147 = vunpack.c.l.b16 %v650
    %v1148 = vunpack.c.h.b16 %v650
    %v1149 = vunpack.c.l.b16 %v651
    %v1150 = vunpack.c.l.b16 %v652
    %v1151 = vunpack.c.h.b16 %v652
    %v1152 = vunpack.c.l.b16 %v653
    %v1153 = vunpack.c.l.b16 %v654
    %v1154 = vunpack.c.h.b16 %v654
    %v1155 = vunpack.c.l.b16 %v655
    %v1156 = vunpack.c.l.b16 %v656
    %v1157 = vunpack.c.h.b16 %v656
    %v1158 = vunpack.c.l.b16 %v657
    %v1159 = vunpack.c.l.b16 %v658
    %v1160 = vunpack.c.h.b16 %v658
    %v1161 = vunpack.c.l.b16 %v659
    %v1162 = vunpack.c.l.b16 %v660
    %v1163 = vunpack.c.h.b16 %v660
    %v1164 = vunpack.c.l.b16 %v661
    %v1165 = vunpack.c.l.b16 %v662
    %v1166 = vunpack.c.h.b16 %v662
    %v1167 = vunpack.c.l.b16 %v663
    %v1168 = vunpack.c.l.b16 %v664
    %v1169 = vunpack.c.h.b16 %v664
    %v1170 = vunpack.c.l.b16 %v665
    %v1171 = vunpack.c.l.b16 %v666
    %v1172 = vunpack.c.h.b16 %v666
    %v1173 = vunpack.c.l.b16 %v667
    %v1174 = vunpack.c.l.b16 %v668
    %v1175 = vunpack.c.h.b16 %v668
    %v1176 = vunpack.c.l.b16 %v669
    %v1177 = vunpack.c.l.b16 %v670
    %v1178 = vunpack.c.h.b16 %v670
    %v1179 = vunpack.c.l.b16 %v671
    %v1180 = vunpack.c.l.b16 %v672
    %v1181 = vunpack.c.h.b16 %v672
    %v1182 = vunpack.c.l.b16 %v673
    %v1183 = vunpack.c.l.b16 %v674
    %v1184 = vunpack.c.h.b16 %v674
    %v1185 = vunpack.c.l.b16 %v675
    %v1186 = vunpack.c.l.b16 %v676
    %v1187 = vunpack.c.h.b16 %v676
    %v1188 = vunpack.c.l.b16 %v677
    %v1189 = vunpack.c.l.b16 %v678
    %v1190 = vunpack.c.h.b16 %v678
    %v1191 = vunpack.c.l.b16 %v679
    %v1192 = vunpack.c.l.b16 %v680
    %v1193 = vunpack.c.h.b16 %v680
    %v1194 = vunpack.c.l.b16 %v681
    %v1195 = vunpack.c.l.b16 %v682
    %v1196 = vunpack.c.h.b16 %v682
    %v1197 = vunpack.c.l.b16 %v683
    %v1198 = vunpack.c.l.b16 %v684
    %v1199 = vunpack.c.h.b16 %v684
    %v1200 = vunpack.c.l.b16 %v685
    %v1201 = vpack.c.b16 %v964, %v961
    %v1202 = vpack.c.b16 %v965, %v962
    %v1203 = vpack.c.b16 %v966, %v963
    %v1204 = vpack.c.b16 %v970, %v967
    %v1205 = vpack.c.b16 %v971, %v968
    %v1206 = vpack.c.b16 %v972, %v969
    %v1207 = vpack.c.b16 %v976, %v973
    %v1208 = vpack.c.b16 %v977, %v974
    %v1209 = vpack.c.b16 %v978, %v975
    %v1210 = vpack.c.b16 %v982, %v979
    %v1211 = vpack.c.b16 %v983, %v980
    %v1212 = vpack.c.b16 %v984, %v981
    %v1213 = vpack.c.b16 %v988, %v985
    %v1214 = vpack.c.b16 %v989, %v986
    %v1215 = vpack.c.b16 %v990, %v987
    %v1216 = vpack.c.b16 %v994, %v991
    %v1217 = vpack.c.b16 %v995, %v992
    %v1218 = vpack.c.b16 %v996, %v993
    %v1219 = vpack.c.b16 %v1000, %v997
    %v1220 = vpack.c.b16 %v1001, %v998
    %v1221 = vpack.c.b16 %v1002, %v999
    %v1222 = vpack.c.b16 %v1006, %v1003
    %v1223 = vpack.c.b16 %v1007, %v1004
    %v1224 = vpack.c.b16 %v1008, %v1005
    %v1225 = vpack.c.b16 %v1012, %v1009
    %v1226 = vpack.c.b16 %v1013, %v1010
    %v1227 = vpack.c.b16 %v1014, %v1011
    %v1228 = vpack.c.b16 %v1018, %v1015
    %v1229 = vpack.c.b16 %v1019, %v1016
    %v1230 = vpack.c.b16 %v1020, %v1017
    %v1231 = vpack.c.b16 %v1024, %v1021
    %v1232 = vpack.c.b16 %v1025, %v1022
    %v1233 = vpack.c.b16 %v1026, %v1023
    %v1234 = vpack.c.b16 %v1030, %v1027
    %v1235 = vpack.c.b16 %v1031, %v1028
    %v1236 = vpack.c.b16 %v1032, %v1029
    %v1237 = vpack.c.b16 %v1036, %v1033
    %v1238 = vpack.c.b16 %v1037, %v1034
    %v1239 = vpack.c.b16 %v1038, %v1035
    %v1240 = vpack.c.b16 %v1042, %v1039
    %v1241 = vpack.c.b16 %v1043, %v1040
    %v1242 = vpack.c.b16 %v1044, %v1041
    %v1243 = vpack.c.b16 %v1048, %v1045
    %v1244 = vpack.c.b16 %v1049, %v1046
    %v1245 = vpack.c.b16 %v1050, %v1047
    %v1246 = vpack.c.b16 %v1054, %v1051
    %v1247 = vpack.c.b16 %v1055, %v1052
    %v1248 = vpack.c.b16 %v1056, %v1053
    %v1249 = vpack.c.b16 %v1060, %v1057
    %v1250 = vpack.c.b16 %v1061, %v1058
    %v1251 = vpack.c.b16 %v1062, %v1059
    %v1252 = vpack.c.b16 %v1066, %v1063
    %v1253 = vpack.c.b16 %v1067, %v1064
    %v1254 = vpack.c.b16 %v1068, %v1065
    %v1255 = vpack.c.b16 %v1072, %v1069
    %v1256 = vpack.c.b16 %v1073, %v1070
    %v1257 = vpack.c.b16 %v1074, %v1071
    %v1258 = vpack.c.b16 %v1078, %v1075
    %v1259 = vpack.c.b16 %v1079, %v1076
    %v1260 = vpack.c.b16 %v1080, %v1077
    %v1261 = vpack.c.b16 %v1084, %v1081
    %v1262 = vpack.c.b16 %v1085, %v1082
    %v1263 = vpack.c.b16 %v1086, %v1083
    %v1264 = vpack.c.b16 %v1090, %v1087
    %v1265 = vpack.c.b16 %v1091, %v1088
    %v1266 = vpack.c.b16 %v1092, %v1089
    %v1267 = vpack.c.b16 %v1096, %v1093
    %v1268 = vpack.c.b16 %v1097, %v1094
    %v1269 = vpack.c.b16 %v1098, %v1095
    %v1270 = vpack.c.b16 %v1102, %v1099
    %v1271 = vpack.c.b16 %v1103, %v1100
    %v1272 = vpack.c.b16 %v1104, %v1101
    %v1273 = vpack.c.b16 %v1108, %v1105
    %v1274 = vpack.c.b16 %v1109, %v1106
    %v1275 = vpack.c.b16 %v1110, %v1107
    %v1276 = vpack.c.b16 %v1114, %v1111
    %v1277 = vpack.c.b16 %v1115, %v1112
    %v1278 = vpack.c.b16 %v1116, %v1113
    %v1279 = vpack.c.b16 %v1120, %v1117
    %v1280 = vpack.c.b16 %v1121, %v1118
    %v1281 = vpack.c.b16 %v1122, %v1119
    %v1282 = vpack.c.b16 %v1126, %v1123
    %v1283 = vpack.c.b16 %v1127, %v1124
    %v1284 = vpack.c.b16 %v1128, %v1125
    %v1285 = vpack.c.b16 %v1132, %v1129
    %v1286 = vpack.c.b16 %v1133, %v1130
    %v1287 = vpack.c.b16 %v1134, %v1131
    %v1288 = vpack.c.b16 %v1138, %v1135
    %v1289 = vpack.c.b16 %v1139, %v1136
    %v1290 = vpack.c.b16 %v1140, %v1137
    %v1291 = vpack.c.b16 %v1144, %v1141
    %v1292 = vpack.c.b16 %v1145, %v1142
    %v1293 = vpack.c.b16 %v1146, %v1143
    %v1294 = vpack.c.b16 %v1150, %v1147
    %v1295 = vpack.c.b16 %v1151, %v1148
    %v1296 = vpack.c.b16 %v1152, %v1149
    %v1297 = vpack.c.b16 %v1156, %v1153
    %v1298 = vpack.c.b16 %v1157, %v1154
    %v1299 = vpack.c.b16 %v1158, %v1155
    %v1300 = vpack.c.b16 %v1162, %v1159
    %v1301 = vpack.c.b16 %v1163, %v1160
    %v1302 = vpack.c.b16 %v1164, %v1161
    %v1303 = vpack.c.b16 %v1168, %v1165
    %v1304 = vpack.c.b16 %v1169, %v1166
    %v1305 = vpack.c.b16 %v1170, %v1167
    %v1306 = vpack.c.b16 %v1174, %v1171
    %v1307 = vpack.c.b16 %v1175, %v1172
    %v1308 = vpack.c.b16 %v1176, %v1173
    %v1309 = vpack.c.b16 %v1180, %v1177
    %v1310 = vpack.c.b16 %v1181, %v1178
    %v1311 = vpack.c.b16 %v1182, %v1179
    %v1312 = vpack.c.b16 %v1186, %v1183
    %v1313 = vpack.c.b16 %v1187, %v1184
    %v1314 = vpack.c.b16 %v1188, %v1185
    %v1315 = vpack.c.b16 %v1192, %v1189
    %v1316 = vpack.c.b16 %v1193, %v1190
    %v1317 = vpack.c.b16 %v1194, %v1191
    %v1318 = vpack.c.b16 %v1198, %v1195
    %v1319 = vpack.c.b16 %v1199, %v1196
    %v1320 = vpack.c.b16 %v1200, %v1197
    %1441 = vmatprep.subr.bf16.mxu0 %v1202
    %1442 = vmatpush1.bf16.msra.mxu0 %v1201
    %1443 = vmatprep.subr.bf16.mxu0 %v1205
    %1444 = vmatpush1.bf16.msra.mxu0 %v1204
    %1445 = vmatprep.subr.bf16.mxu0 %v1208
    %1446 = vmatpush1.bf16.msra.mxu0 %v1207
    %1447 = vmatprep.subr.bf16.mxu0 %v1211
    %1448 = vmatpush1.bf16.msra.mxu0 %v1210
    %1449 = vmatprep.subr.bf16.mxu0 %v1214
    %1450 = vmatpush1.bf16.msra.mxu0 %v1213
    %1451 = vmatprep.subr.bf16.mxu0 %v1217
    %1452 = vmatpush1.bf16.msra.mxu0 %v1216
    %1453 = vmatprep.subr.bf16.mxu0 %v1220
    %1454 = vmatpush1.bf16.msra.mxu0 %v1219
    %1455 = vmatprep.subr.bf16.mxu0 %v1223
    %1456 = vmatpush1.bf16.msra.mxu0 %v1222
    %1457 = vmatprep.subr.bf16.mxu0 %v1226
    %1458 = vmatpush1.bf16.msra.mxu0 %v1225
    %1459 = vmatprep.subr.bf16.mxu0 %v1229
    %1460 = vmatpush1.bf16.msra.mxu0 %v1228
    %1461 = vmatprep.subr.bf16.mxu0 %v1232
    %1462 = vmatpush1.bf16.msra.mxu0 %v1231
    %1463 = vmatprep.subr.bf16.mxu0 %v1235
    %1464 = vmatpush1.bf16.msra.mxu0 %v1234
    %1465 = vmatprep.subr.bf16.mxu0 %v1238
    %1466 = vmatpush1.bf16.msra.mxu0 %v1237
    %1467 = vmatprep.subr.bf16.mxu0 %v1241
    %1468 = vmatpush1.bf16.msra.mxu0 %v1240
    %1469 = vmatprep.subr.bf16.mxu0 %v1244
    %1470 = vmatpush1.bf16.msra.mxu0 %v1243
    %1471 = vmatprep.subr.bf16.mxu0 %v1247
    %1472 = vmatpush1.bf16.msra.mxu0 %v1246
    %1473 = vmatprep.mubr.bf16.mxu0 %v522
    %1474 = vmatmul.mubr.bf16.gmra.mrb[0].mxu0 %v521
    %v1475 = vpop.f32.mrb[0].mxu0
    %v1476 = vadd.f32 %v755, %v1475
    %v1477 = vpop.f32.mrb[0].mxu0
    %v1478 = vadd.f32 %v757, %v1477
    %v1479 = vpop.f32.mrb[0].mxu0
    %v1480 = vpop.f32.mrb[0].mxu0
    %1481 = vdwg.mxu0
    %1482 = vmatprep.subr.bf16.mxu0 %v1250
    %1483 = vmatpush1.bf16.msra.mxu0 %v1249
    %1484 = vmatprep.subr.bf16.mxu0 %v1253
    %1485 = vmatpush1.bf16.msra.mxu0 %v1252
    %1486 = vmatprep.subr.bf16.mxu0 %v1256
    %1487 = vmatpush1.bf16.msra.mxu0 %v1255
    %1488 = vmatprep.subr.bf16.mxu0 %v1259
    %1489 = vmatpush1.bf16.msra.mxu0 %v1258
    %1490 = vmatprep.subr.bf16.mxu0 %v1262
    %1491 = vmatpush1.bf16.msra.mxu0 %v1261
    %1492 = vmatprep.subr.bf16.mxu0 %v1265
    %1493 = vmatpush1.bf16.msra.mxu0 %v1264
    %1494 = vmatprep.subr.bf16.mxu0 %v1268
    %1495 = vmatpush1.bf16.msra.mxu0 %v1267
    %1496 = vmatprep.subr.bf16.mxu0 %v1271
    %1497 = vmatpush1.bf16.msra.mxu0 %v1270
    %1498 = vmatprep.subr.bf16.mxu0 %v1274
    %1499 = vmatpush1.bf16.msra.mxu0 %v1273
    %1500 = vmatprep.subr.bf16.mxu0 %v1277
    %1501 = vmatpush1.bf16.msra.mxu0 %v1276
    %1502 = vmatprep.subr.bf16.mxu0 %v1280
    %1503 = vmatpush1.bf16.msra.mxu0 %v1279
    %1504 = vmatprep.subr.bf16.mxu0 %v1283
    %1505 = vmatpush1.bf16.msra.mxu0 %v1282
    %1506 = vmatprep.subr.bf16.mxu0 %v1286
    %1507 = vmatpush1.bf16.msra.mxu0 %v1285
    %1508 = vmatprep.subr.bf16.mxu0 %v1289
    %1509 = vmatpush1.bf16.msra.mxu0 %v1288
    %1510 = vmatprep.subr.bf16.mxu0 %v1292
    %1511 = vmatpush1.bf16.msra.mxu0 %v1291
    %1512 = vmatprep.subr.bf16.mxu0 %v1295
    %1513 = vmatpush1.bf16.msra.mxu0 %v1294
    %1514 = vmatprep.mubr.bf16.mxu0 %v524
    %1515 = vmatmul.mubr.bf16.gmra.mrb[0].mxu0 %v523
    %v1516 = vpop.f32.mrb[0].mxu0
    %v1517 = vadd.f32 %v1476, %v1516
    %v1518 = vpop.f32.mrb[0].mxu0
    %v1519 = vadd.f32 %v1478, %v1518
    %v1520 = vpop.f32.mrb[0].mxu0
    %v1521 = vpop.f32.mrb[0].mxu0
    %1522 = vdwg.mxu0
    %1523 = vmatprep.subr.bf16.mxu0 %v1298
    %1524 = vmatpush1.bf16.msra.mxu0 %v1297
    %1525 = vmatprep.subr.bf16.mxu0 %v1301
    %1526 = vmatpush1.bf16.msra.mxu0 %v1300
    %1527 = vmatprep.subr.bf16.mxu0 %v1304
    %1528 = vmatpush1.bf16.msra.mxu0 %v1303
    %1529 = vmatprep.subr.bf16.mxu0 %v1307
    %1530 = vmatpush1.bf16.msra.mxu0 %v1306
    %1531 = vmatprep.subr.bf16.mxu0 %v1310
    %1532 = vmatpush1.bf16.msra.mxu0 %v1309
    %1533 = vmatprep.subr.bf16.mxu0 %v1313
    %1534 = vmatpush1.bf16.msra.mxu0 %v1312
    %1535 = vmatprep.subr.bf16.mxu0 %v1316
    %1536 = vmatpush1.bf16.msra.mxu0 %v1315
    %1537 = vmatprep.subr.bf16.mxu0 %v1319
    %1538 = vmatpush1.bf16.msra.mxu0 %v1318
    %1539 = vmatprep.subr.bf16.mxu0 0
    %1540 = vmatpush1.bf16.msra.mxu0 0
    %1541 = vmatprep.subr.bf16.mxu0 0
    %1542 = vmatpush1.bf16.msra.mxu0 0
    %1543 = vmatprep.subr.bf16.mxu0 0
    %1544 = vmatpush1.bf16.msra.mxu0 0
    %1545 = vmatprep.subr.bf16.mxu0 0
    %1546 = vmatpush1.bf16.msra.mxu0 0
    %1547 = vmatprep.subr.bf16.mxu0 0
    %1548 = vmatpush1.bf16.msra.mxu0 0
    %1549 = vmatprep.subr.bf16.mxu0 0
    %1550 = vmatpush1.bf16.msra.mxu0 0
    %1551 = vmatprep.subr.bf16.mxu0 0
    %1552 = vmatpush1.bf16.msra.mxu0 0
    %1553 = vmatprep.subr.bf16.mxu0 0
    %1554 = vmatpush1.bf16.msra.mxu0 0
    %1555 = vmatprep.mubr.bf16.mxu0 0
    %1556 = vmatmul.mubr.bf16.gmra.mrb[0].mxu0 %v525
    %v1557 = vpop.f32.mrb[0].mxu0
    %v1558 = vadd.f32 %v1517, %v1557
    %v1559 = vpop.f32.mrb[0].mxu0
    %v1560 = vadd.f32 %v1519, %v1559
    %v1561 = vpop.f32.mrb[0].mxu0
    %v1562 = vpop.f32.mrb[0].mxu0
    %1563 = vdwg.mxu0
    %1564 = vmatprep.subr.bf16.mxu0 0
    %1565 = vmatpush1.bf16.msra.mxu0 %v1203
    %1566 = vmatprep.subr.bf16.mxu0 0
    %1567 = vmatpush1.bf16.msra.mxu0 %v1206
    %1568 = vmatprep.subr.bf16.mxu0 0
    %1569 = vmatpush1.bf16.msra.mxu0 %v1209
    %1570 = vmatprep.subr.bf16.mxu0 0
    %1571 = vmatpush1.bf16.msra.mxu0 %v1212
    %1572 = vmatprep.subr.bf16.mxu0 0
    %1573 = vmatpush1.bf16.msra.mxu0 %v1215
    %1574 = vmatprep.subr.bf16.mxu0 0
    %1575 = vmatpush1.bf16.msra.mxu0 %v1218
    %1576 = vmatprep.subr.bf16.mxu0 0
    %1577 = vmatpush1.bf16.msra.mxu0 %v1221
    %1578 = vmatprep.subr.bf16.mxu0 0
    %1579 = vmatpush1.bf16.msra.mxu0 %v1224
    %1580 = vmatprep.subr.bf16.mxu0 0
    %1581 = vmatpush1.bf16.msra.mxu0 %v1227
    %1582 = vmatprep.subr.bf16.mxu0 0
    %1583 = vmatpush1.bf16.msra.mxu0 %v1230
    %1584 = vmatprep.subr.bf16.mxu0 0
    %1585 = vmatpush1.bf16.msra.mxu0 %v1233
    %1586 = vmatprep.subr.bf16.mxu0 0
    %1587 = vmatpush1.bf16.msra.mxu0 %v1236
    %1588 = vmatprep.subr.bf16.mxu0 0
    %1589 = vmatpush1.bf16.msra.mxu0 %v1239
    %1590 = vmatprep.subr.bf16.mxu0 0
    %1591 = vmatpush1.bf16.msra.mxu0 %v1242
    %1592 = vmatprep.subr.bf16.mxu0 0
    %1593 = vmatpush1.bf16.msra.mxu0 %v1245
    %1594 = vmatprep.subr.bf16.mxu0 0
    %1595 = vmatpush1.bf16.msra.mxu0 %v1248
    %1596 = vmatprep.mubr.bf16.mxu0 %v522
    %1597 = vmatmul.mubr.bf16.gmra.mrb[0].mxu0 %v521
    %v1598 = vpop.f32.mrb[0].mxu0
    %v1599 = vadd.f32 %v796, %v1598
    %v1600 = vpop.f32.mrb[0].mxu0
    %v1601 = vpop.f32.mrb[0].mxu0
    %v1602 = vpop.f32.mrb[0].mxu0
    %1603 = vdwg.mxu0
    %1604 = vmatprep.subr.bf16.mxu0 0
    %1605 = vmatpush1.bf16.msra.mxu0 %v1251
    %1606 = vmatprep.subr.bf16.mxu0 0
    %1607 = vmatpush1.bf16.msra.mxu0 %v1254
    %1608 = vmatprep.subr.bf16.mxu0 0
    %1609 = vmatpush1.bf16.msra.mxu0 %v1257
    %1610 = vmatprep.subr.bf16.mxu0 0
    %1611 = vmatpush1.bf16.msra.mxu0 %v1260
    %1612 = vmatprep.subr.bf16.mxu0 0
    %1613 = vmatpush1.bf16.msra.mxu0 %v1263
    %1614 = vmatprep.subr.bf16.mxu0 0
    %1615 = vmatpush1.bf16.msra.mxu0 %v1266
    %1616 = vmatprep.subr.bf16.mxu0 0
    %1617 = vmatpush1.bf16.msra.mxu0 %v1269
    %1618 = vmatprep.subr.bf16.mxu0 0
    %1619 = vmatpush1.bf16.msra.mxu0 %v1272
    %1620 = vmatprep.subr.bf16.mxu0 0
    %1621 = vmatpush1.bf16.msra.mxu0 %v1275
    %1622 = vmatprep.subr.bf16.mxu0 0
    %1623 = vmatpush1.bf16.msra.mxu0 %v1278
    %1624 = vmatprep.subr.bf16.mxu0 0
    %1625 = vmatpush1.bf16.msra.mxu0 %v1281
    %1626 = vmatprep.subr.bf16.mxu0 0
    %1627 = vmatpush1.bf16.msra.mxu0 %v1284
    %1628 = vmatprep.subr.bf16.mxu0 0
    %1629 = vmatpush1.bf16.msra.mxu0 %v1287
    %1630 = vmatprep.subr.bf16.mxu0 0
    %1631 = vmatpush1.bf16.msra.mxu0 %v1290
    %1632 = vmatprep.subr.bf16.mxu0 0
    %1633 = vmatpush1.bf16.msra.mxu0 %v1293
    %1634 = vmatprep.subr.bf16.mxu0 0
    %1635 = vmatpush1.bf16.msra.mxu0 %v1296
    %1636 = vmatprep.mubr.bf16.mxu0 %v524
    %1637 = vmatmul.mubr.bf16.gmra.mrb[0].mxu0 %v523
    %v1638 = vpop.f32.mrb[0].mxu0
    %v1639 = vadd.f32 %v1599, %v1638
    %v1640 = vpop.f32.mrb[0].mxu0
    %v1641 = vpop.f32.mrb[0].mxu0
    %v1642 = vpop.f32.mrb[0].mxu0
    %1643 = vdwg.mxu0
    %1644 = vmatprep.subr.bf16.mxu0 0
    %1645 = vmatpush1.bf16.msra.mxu0 %v1299
    %1646 = vmatprep.subr.bf16.mxu0 0
    %1647 = vmatpush1.bf16.msra.mxu0 %v1302
    %1648 = vmatprep.subr.bf16.mxu0 0
    %1649 = vmatpush1.bf16.msra.mxu0 %v1305
    %1650 = vmatprep.subr.bf16.mxu0 0
    %1651 = vmatpush1.bf16.msra.mxu0 %v1308
    %1652 = vmatprep.subr.bf16.mxu0 0
    %1653 = vmatpush1.bf16.msra.mxu0 %v1311
    %1654 = vmatprep.subr.bf16.mxu0 0
    %1655 = vmatpush1.bf16.msra.mxu0 %v1314
    %1656 = vmatprep.subr.bf16.mxu0 0
    %1657 = vmatpush1.bf16.msra.mxu0 %v1317
    %1658 = vmatprep.subr.bf16.mxu0 0
    %1659 = vmatpush1.bf16.msra.mxu0 %v1320
    %1660 = vmatprep.subr.bf16.mxu0 0
    %1661 = vmatpush1.bf16.msra.mxu0 0
    %1662 = vmatprep.subr.bf16.mxu0 0
    %1663 = vmatpush1.bf16.msra.mxu0 0
    %1664 = vmatprep.subr.bf16.mxu0 0
    %1665 = vmatpush1.bf16.msra.mxu0 0
    %1666 = vmatprep.subr.bf16.mxu0 0
    %1667 = vmatpush1.bf16.msra.mxu0 0
    %1668 = vmatprep.subr.bf16.mxu0 0
    %1669 = vmatpush1.bf16.msra.mxu0 0
    %1670 = vmatprep.subr.bf16.mxu0 0
    %1671 = vmatpush1.bf16.msra.mxu0 0
    %1672 = vmatprep.subr.bf16.mxu0 0
    %1673 = vmatpush1.bf16.msra.mxu0 0
    %1674 = vmatprep.subr.bf16.mxu0 0
    %1675 = vmatpush1.bf16.msra.mxu0 0
    %1676 = vmatprep.mubr.bf16.mxu0 0
    %1677 = vmatmul.mubr.bf16.gmra.mrb[0].mxu0 %v525
    %v1678 = vpop.f32.mrb[0].mxu0
    %v1679 = vadd.f32 %v1639, %v1678
    %v1680 = vpop.f32.mrb[0].mxu0
    %v1681 = vpop.f32.mrb[0].mxu0
    %v1682 = vpop.f32.mrb[0].mxu0
    %1683 = vdwg.mxu0
    %v1684 = vld [vmem:[%s7] sm:$0x7]
    %v1686 = vlaneseq
    %v1687 = vshrl.u32 %v1686, 7
    %v1688 = vsub.s32 0, %v1687
    %v1689 = vrot.slane %v1684, %v1688
    %v1690 = vlaneseq
    %v1691 = vshrl.u32 %v1690, 7
    %v1692 = vsub.s32 1, %v1691
    %v1693 = vrot.slane %v1684, %v1692
    %v1694 = vlaneseq
    %v1695 = vshrl.u32 %v1694, 7
    %v1696 = vsub.s32 2, %v1695
    %v1697 = vrot.slane %v1684, %v1696
    %v1701 = vadd.f32 %v1558, %v1689
    %v1702 = vadd.f32 %v1560, %v1693
    %v1703 = vadd.f32 %v1679, %v1697
    %v1704 = vmax.f32 %v1701, 0.0
    %v1705 = vmax.f32 %v1702, 0.0
    %v1706 = vmax.f32 %v1703, 0.0
    %v1707 = vld [vmem:[%s9] sm:$0x7]
    %v1709 = vlaneseq
    %v1710 = vshrl.u32 %v1709, 7
    %v1711 = vsub.s32 0, %v1710
    %v1712 = vrot.slane %v1707, %v1711
    %v1713 = vlaneseq
    %v1714 = vshrl.u32 %v1713, 7
    %v1715 = vsub.s32 1, %v1714
    %v1716 = vrot.slane %v1707, %v1715
    %v1717 = vlaneseq
    %v1718 = vshrl.u32 %v1717, 7
    %v1719 = vsub.s32 2, %v1718
    %v1720 = vrot.slane %v1707, %v1719
    %v1724 = vmul.f32 %v1704, %v1712
    %v1725 = vmul.f32 %v1705, %v1716
    %v1726 = vmul.f32 %v1706, %v1720
    %v1727 = vadd.f32 %v1724, %v1725
    %v1728 = vadd.f32 %v1727, %v1726
    %1729 = vadd.xlane.f32.xlu0 %v1728
    %v1730 = vpop.xlane.xlu0 %1729
    %s1731 = sld [smem:[#allocation2]]
    %v1732 = vstv %s1731
    %v1733 = vadd.f32 %v1730, %v1732
    %vm1734 = vcmask 7168
    %1735 = vst.msk [vmem:[%s11] sm:$0xff] %vm1734, %v1733
    // Predicated region
    $region54: #{tpu_custom_call.1} parent=1 // pred_check
      _
    $region55: #{tpu_custom_call.1} parent=1 // pred_check_branch
      %1737 = sbr.rel (0) target = $region57
    $region56: #{tpu_custom_call.1} parent=1 // pred_region
      _
    $region57: #{tpu_custom_call.1} parent=1 // pred_fallthru
      _
    // Predicated region
    $region58: #{tpu_custom_call.1} parent=1 // pred_check
      _
    $region59: #{tpu_custom_call.1} parent=1 // pred_check_branch
      %1739 = sbr.rel (0) target = $region61
    $region60: #{tpu_custom_call.1} parent=1 // pred_region
      _
    $region61: #{tpu_custom_call.1} parent=1 // pred_fallthru
      _
    %1740 = vsyncpa [#allocation4], 1
    %1741 = vsyncpa [#allocation6], 1

</llo_original>
